<compile_context>
chip_gen: v5e
topology: v5e:2x2
jax: 0.10.0
libtpu: 0.0.40
codegen_flags: <defaults>
</compile_context>

<pallas_src>
import jax
import jax.numpy as jnp
from jax.experimental import pallas as pl
from jax.experimental.pallas import tpu as pltpu


# ----------------------------- Pallas kernel ------------------------------- #
def masked_mean_kernel(h_ref, m_ref, inv_ref, o_ref, acc_ref):
    # h_ref:   (TB, TL, H)  native dtype (bf16)
    # m_ref:   (TB, 1, TL)  same dtype as h (0/1 values, lane-dense)
    # inv_ref: (TB, 1)      f32, 1 / clamp(sum(mask), 1e-9), precomputed
    # o_ref:   (TB, H)      f32 output block
    # acc_ref: (TB, 1, H)   f32 scratch accumulator (persists across L steps)
    l = pl.program_id(1)

    @pl.when(l == 0)
    def _():
        acc_ref[...] = jnp.zeros_like(acc_ref)

    # Masked partial sum on the MXU: per batch row, (1, TL) @ (TL, H) -> (1, H),
    # bf16 operands native on all generations, fp32 accumulation.
    acc_ref[...] += jnp.einsum(
        "bxl,blh->bxh",
        m_ref[...],
        h_ref[...],
        preferred_element_type=jnp.float32,
    )

    @pl.when(l == pl.num_programs(1) - 1)
    def _():
        acc = acc_ref[...]                       # (TB, 1, H) f32
        out = acc[:, 0, :] * inv_ref[...]        # (TB, H) * (TB, 1) broadcast
        o_ref[...] = out.astype(o_ref.dtype)     # sublane/lane-dense store


def _choose_seq_tile(L, max_tl):
    """Pick (TL, Lp): largest 128-multiple <= max_tl dividing the padded length.
    Avoids padding (a full HBM copy of hidden_states) whenever L already fits."""
    if L <= max_tl:
        return L, L
    Lp = pl.cdiv(L, 128) * 128
    TL = (min(max_tl, Lp) // 128) * 128
    while Lp % TL != 0:
        TL -= 128
    return TL, Lp


def masked_mean_pool(hidden_states, attmask, *, tb=8, tl=512):
    """hidden_states: (B, L, H) (any float dtype, typically bf16);
    attmask: (B, L) int/float -> (B, H) float32 masked mean over L."""
    B, L, H = hidden_states.shape
    dt = hidden_states.dtype

    # Exact fp32 denominator reciprocal, hoisted out of the kernel.
    denom = jnp.maximum(
        jnp.sum(attmask.astype(jnp.float32), axis=1, keepdims=True), 1e-9
    )
    inv = 1.0 / denom                                        # (B, 1) f32

    # Tile sizes.  TB=8 -> sublane-dense output blocks (or full batch if small).
    TB = min(tb, B)
    Bp = pl.cdiv(B, TB) * TB
    TL, Lp = _choose_seq_tile(L, tl)

    h = hidden_states
    m = attmask.astype(dt)                                   # 0/1 exact in bf16
    if Bp != B or Lp != L:
        # zero-padded mask -> padded positions contribute nothing to the sum.
        h = jnp.pad(h, ((0, Bp - B), (0, Lp - L), (0, 0)))
        m = jnp.pad(m, ((0, Bp - B), (0, Lp - L)))
    if Bp != B:
        inv = jnp.pad(inv, ((0, Bp - B), (0, 0)), constant_values=1.0)
    m = m.reshape(Bp, 1, Lp)                                 # lane-dense MXU lhs layout

    grid = (Bp // TB, Lp // TL)

    # Advisory cost: one MAC per (masked) element, hidden read dominates bytes.
    cost = pl.CostEstimate(
        flops=2 * Bp * Lp * H,
        transcendentals=0,
        bytes_accessed=Bp * Lp * H * h.dtype.itemsize
        + Bp * Lp * m.dtype.itemsize
        + Bp * H * 4
        + Bp * 4,
    )

    out = pl.pallas_call(
        masked_mean_kernel,
        out_shape=jax.ShapeDtypeStruct((Bp, H), jnp.float32),
        grid_spec=pltpu.PrefetchScalarGridSpec(
            num_scalar_prefetch=0,
            grid=grid,
            in_specs=[
                pl.BlockSpec((TB, TL, H), lambda b, l: (b, l, 0)),
                pl.BlockSpec((TB, 1, TL), lambda b, l: (b, 0, l)),
                pl.BlockSpec((TB, 1), lambda b, l: (b, 0)),
            ],
            out_specs=pl.BlockSpec((TB, H), lambda b, l: (b, 0)),
            scratch_shapes=[pltpu.VMEM((TB, 1, H), jnp.float32)],
        ),
        compiler_params=pltpu.CompilerParams(
            # batch axis shardable across v7x's 2 TensorCores; L is a reduction.
            dimension_semantics=("parallel", "arbitrary"),
            # plenty for double-buffered (TB, TL, H) bf16 tiles, with headroom
            # on v7x's 64 MiB physical VMEM.
            vmem_limit_bytes=32 * 1024 * 1024,
        ),
        cost_estimate=cost,
    )(h, m, inv)
    return out[:B]


# --------------------------- synthetic BERT stub --------------------------- #
# TODO(synk): the real `bert_model` is an external HuggingFace module passed to
# __init__; here it is replaced by a deterministic embedding + dense stub that
# produces bf16 hidden_states of shape (B, L, H).
def init_bert_stub_params(key, vocab_size, hidden_dim):
    k1, k2 = jax.random.split(key, 2)
    emb = jax.random.normal(k1, (vocab_size, hidden_dim), jnp.float32) * 0.02
    w = jax.random.normal(k2, (hidden_dim, hidden_dim), jnp.float32) * 0.02
    b = jnp.zeros((hidden_dim,), jnp.float32)
    return {"emb": emb, "w": w, "b": b}


def bert_stub(params, input_ids, attention_mask):
    # (B, L) int32 -> (B, L, H) bf16 (native dtype of a real BERT on TPU)
    h = params["emb"][input_ids]
    h = jnp.tanh(h @ params["w"] + params["b"])
    return h.astype(jnp.bfloat16)


# --------------------------- module forward pass --------------------------- #
def text_encoder_mean_forward(params, text):
    """text: (B, 2*num_words) int32 = [ids | attention_mask] -> (B, H) float32."""
    batch_size, total = text.shape
    num_words = total // 2
    text_ids = text[:, :num_words]
    text_attmask = text[:, num_words:]
    hidden_states = bert_stub(params, text_ids, text_attmask)
    return masked_mean_pool(hidden_states, text_attmask)


if __name__ == "__main__":
    B, L, H, V = 16, 384, 64, 1000
    key = jax.random.PRNGKey(0)
    kp, kid = jax.random.split(key, 2)

    params = init_bert_stub_params(kp, V, H)

    ids = jax.random.randint(kid, (B, L), 0, V, dtype=jnp.int32)
    # deterministic varied sequence lengths (row 0 has length 0 -> clamp path)
    lengths = (jnp.arange(B, dtype=jnp.int32) * 37) % (L + 1)
    mask = (jnp.arange(L, dtype=jnp.int32)[None, :] < lengths[:, None]).astype(jnp.int32)
    text = jnp.concatenate([ids, mask], axis=1)              # (B, 2*L)

    out = text_encoder_mean_forward(params, text)
    out = jax.block_until_ready(out)

    # reference check in plain JAX on the same bf16 hidden states
    h_ref = bert_stub(params, ids, mask).astype(jnp.float32)
    m_ref = mask.astype(jnp.float32)[..., None]
    ref = jnp.sum(h_ref * m_ref, axis=1) / jnp.maximum(jnp.sum(m_ref, axis=1), 1e-9)

    assert out.shape == (B, H)
    assert out.dtype == jnp.float32
    assert jnp.allclose(out, ref, atol=1e-4, rtol=1e-4), float(jnp.max(jnp.abs(out - ref)))

    print("KERNEL_OK")
</pallas_src>

<mosaic_0001>
module attributes {stable_mosaic.version = 11 : i64} {
  func.func @masked_mean_kernel(%arg0: i32, %arg1: i32, %arg2: memref<8x384x64xbf16, #tpu.memory_space<vmem>>, %arg3: memref<8x1x384xbf16, #tpu.memory_space<vmem>>, %arg4: memref<8x1xf32, #tpu.memory_space<vmem>>, %arg5: memref<8x64xf32, #tpu.memory_space<vmem>>, %arg6: memref<8x1x64xf32, #tpu.memory_space<vmem>>) attributes {dimension_semantics = [#tpu.dimension_semantics<parallel>, #tpu.dimension_semantics<arbitrary>], iteration_bounds = array<i64: 2, 1>, scalar_prefetch = 0 : i64, scratch_operands = 1 : i64, tpu.core_type = #tpu.core_type<tc>, window_params = [{transform_indices = @transform_0, window_bounds = array<i64: 8, 384, 64>}, {transform_indices = @transform_1, window_bounds = array<i64: 8, 1, 384>}, {transform_indices = @transform_2, window_bounds = array<i64: 8, 1>}, {transform_indices = @transform_3, window_bounds = array<i64: 8, 64>}]} {
    %c0_i32 = arith.constant 0 : i32
    %0 = arith.cmpi eq, %arg1, %c0_i32 : i32
    %1 = arith.extui %0 : i1 to i32
    %c0_i32_0 = arith.constant 0 : i32
    %2 = arith.cmpi ne, %1, %c0_i32_0 : i32
    scf.if %2 {
      %cst_14 = arith.constant 0.000000e+00 : f32
      %12 = vector.broadcast %cst_14 : f32 to vector<8x1x64xf32>
      %c0_15 = arith.constant 0 : index
      %c0_16 = arith.constant 0 : index
      %c0_17 = arith.constant 0 : index
      %13 = vector.load %arg6[%c0_15, %c0_16, %c0_17] : memref<8x1x64xf32, #tpu.memory_space<vmem>>, vector<8x1x64xf32>
      tpu.vector_store %arg6[%c0_15, %c0_16, %c0_17], %12 {strides = array<i32>} : memref<8x1x64xf32, #tpu.memory_space<vmem>>, vector<8x1x64xf32>,
    } else {
    }
    %c0 = arith.constant 0 : index
    %c0_1 = arith.constant 0 : index
    %c0_2 = arith.constant 0 : index
    %3 = vector.load %arg6[%c0, %c0_1, %c0_2] : memref<8x1x64xf32, #tpu.memory_space<vmem>>, vector<8x1x64xf32>
    %c0_3 = arith.constant 0 : index
    %c0_4 = arith.constant 0 : index
    %c0_5 = arith.constant 0 : index
    %4 = vector.load %arg3[%c0_3, %c0_4, %c0_5] : memref<8x1x384xbf16, #tpu.memory_space<vmem>>, vector<8x1x384xbf16>
    %c0_6 = arith.constant 0 : index
    %c0_7 = arith.constant 0 : index
    %c0_8 = arith.constant 0 : index
    %5 = vector.load %arg2[%c0_6, %c0_7, %c0_8] : memref<8x384x64xbf16, #tpu.memory_space<vmem>>, vector<8x384x64xbf16>
    "tpu.trace_start"() <{level = 10 : i32, message = "bxl,blh->bxh"}> : () -> ()
    %cst = arith.constant dense<0.000000e+00> : vector<8x1x64xf32>
    %6 = tpu.matmul %4, %5, %cst {dimension_numbers = #tpu.dot_dimension_numbers<[2], [1], [1], [2], [0, 0, 0, 1, 1, 2], [0], [0]>} : vector<8x1x384xbf16>, vector<8x384x64xbf16>, vector<8x1x64xf32> -> vector<8x1x64xf32>
    "tpu.trace_stop"() : () -> ()
    %7 = arith.addf %3, %6 : vector<8x1x64xf32>
    %c0_9 = arith.constant 0 : index
    %c0_10 = arith.constant 0 : index
    %c0_11 = arith.constant 0 : index
    %8 = vector.load %arg6[%c0_9, %c0_10, %c0_11] : memref<8x1x64xf32, #tpu.memory_space<vmem>>, vector<8x1x64xf32>
    tpu.vector_store %arg6[%c0_9, %c0_10, %c0_11], %7 {strides = array<i32>} : memref<8x1x64xf32, #tpu.memory_space<vmem>>, vector<8x1x64xf32>,
    %c0_i32_12 = arith.constant 0 : i32
    %9 = arith.cmpi eq, %arg1, %c0_i32_12 : i32
    %10 = arith.extui %9 : i1 to i32
    %c0_i32_13 = arith.constant 0 : i32
    %11 = arith.cmpi ne, %10, %c0_i32_13 : i32
    scf.if %11 {
      %c0_14 = arith.constant 0 : index
      %c0_15 = arith.constant 0 : index
      %c0_16 = arith.constant 0 : index
      %12 = vector.load %arg6[%c0_14, %c0_15, %c0_16] : memref<8x1x64xf32, #tpu.memory_space<vmem>>, vector<8x1x64xf32>
      %13 = vector.shape_cast %12 : vector<8x1x64xf32> to vector<8x64xf32>
      %c0_17 = arith.constant 0 : index
      %c0_18 = arith.constant 0 : index
      %14 = vector.load %arg4[%c0_17, %c0_18] : memref<8x1xf32, #tpu.memory_space<vmem>>, vector<8x1xf32>
      %15 = vector.broadcast %14 : vector<8x1xf32> to vector<8x64xf32>
      %16 = arith.mulf %13, %15 : vector<8x64xf32>
      %c0_19 = arith.constant 0 : index
      %c0_20 = arith.constant 0 : index
      %17 = vector.load %arg5[%c0_19, %c0_20] : memref<8x64xf32, #tpu.memory_space<vmem>>, vector<8x64xf32>
      tpu.vector_store %arg5[%c0_19, %c0_20], %16 {strides = array<i32>} : memref<8x64xf32, #tpu.memory_space<vmem>>, vector<8x64xf32>,
    } else {
    }
    return
  }
  func.func @transform_0(%arg0: i32, %arg1: i32) -> (i32, i32, i32) {
    %c0_i32 = arith.constant 0 : i32
    %c0_i32_0 = arith.constant 0 : i32
    return %arg0, %arg1, %c0_i32 : i32, i32, i32
  }
  func.func @transform_1(%arg0: i32, %arg1: i32) -> (i32, i32, i32) {
    %c0_i32 = arith.constant 0 : i32
    %c0_i32_0 = arith.constant 0 : i32
    return %arg0, %c0_i32, %arg1 : i32, i32, i32
  }
  func.func @transform_2(%arg0: i32, %arg1: i32) -> (i32, i32) {
    %c0_i32 = arith.constant 0 : i32
    %c0_i32_0 = arith.constant 0 : i32
    return %arg0, %c0_i32 : i32, i32
  }
  func.func @transform_3(%arg0: i32, %arg1: i32) -> (i32, i32) {
    %c0_i32 = arith.constant 0 : i32
    %c0_i32_0 = arith.constant 0 : i32
    return %arg0, %c0_i32 : i32, i32
  }
}

</mosaic_0001>

<llo_original>
// kernel: tpu_custom_call.1
$region0: #{tpu_custom_call.1}
  #allocation0 [shape = 'u32[]', space=smem, size = 0x4, offset = 0x4, fixed_abs, tag = 'smem constant byte address 0x4 - core index']
  #allocation1 [shape = 'u32[72,128]{1,0:T(1,128)}', space=vmem, size = 0x9000, scoped, tag = 'internal scratch']
  #allocation2 [shape = 'f32[8,1,64]{2,1,0:T(1,128)}', space=vmem, size = 0x1000, scoped, tag = 'scratch operand']
  %s0 = inlined_call_operand.vmem [shape: bf16[16,384,64], index: 0, kind: input, shape index: {}]
  %s1 = inlined_call_operand.vmem [shape: bf16[16,1,384], index: 1, kind: input, shape index: {}]
  %s2 = inlined_call_operand.vmem [shape: f32[16,1], index: 2, kind: input, shape index: {}]
  %s3 = inlined_call_operand.hbm [shape: f32[16,64], index: 3, kind: output, shape index: {}]
  %s4 = sld [smem:[#allocation0]]
  $region53: #{tpu_custom_call.1} parent=0
    _
  %s6 = ssub.s32 1, %s4
  %s7 = scalar_select 0, %s6, %s4
  $region1: #{tpu_custom_call.1} parent=0
    #allocation3 [shape = 'u8[8192]{0}', space=vmem, size = 0x2000, scoped, tag = 'output window, operand 0']
    #allocation4 [shape = 's32[2]{0}', space=sflag, size = 0x8, scoped, tag = 'scoped memory for tpu_custom_call.1']
    %8 = vsyncpa [#allocation4], 0
    %s9 = scalar_lea.sflag [#allocation4], 1
    %10 = vsyncpa %s9, 0
    loop: start=0, step=1, limit=4
    $region2: #{tpu_custom_call.1} parent=1 // loop_pre_header
      _
    $region3: #{tpu_custom_call.1} parent=1 // loop_header
      %s12 = sphi 0, %s16
      %p13 = scmp.ge.s32.totalorder %s12, 4
      %s19 = sphi 0, %s31
      %s20 = sphi 0, %s27
      %s21 = sphi 0, %s19
      %s22 = sphi 0, %s20
      %s23 = sphi 0, %s21
      %s24 = sphi 0, %s22
      %s36 = sphi 0, %s38
      %s39 = sphi 0, %s36
      %s40 = sphi 0, %s39
      %s56 = sphi 0, %s40
      %s64 = sphi 0, %s66
      %s67 = sphi 0, %s64
      %s68 = sphi 0, %s67
      %s84 = sphi 0, %s68
      %s90 = sphi 0, %s92
      %s93 = sphi 0, %s90
      %s94 = sphi 0, %s93
      %s110 = sphi 0, %s94
      %s116 = sphi 0, %s118
      %s119 = sphi 0, %s116
      %s120 = sphi 0, %s119
      %s136 = sphi 0, %s120
    $region4: #{tpu_custom_call.1} parent=1 // loop_header_branch
      %15 = sbr.rel (%p13) target = $region8
    $region5: #{tpu_custom_call.1} parent=1 // loop_body
      %s17 = ssub.s32 %s12, 1
      %s18 = ssub.s32 %s12, 2
      %s25 = sadd.s32 1, %s20
      %p26 = scmp.ge.s32.totalorder %s25, 1
      %s27 = scalar_select %p26, 0, %s25
      %s28 = sadd.s32 1, %s19
      %s29 = scalar_select %p26, %s28, %s19
      %p30 = scmp.ge.s32.totalorder %s29, 2
      %s31 = scalar_select %p30, 0, %s29
      %s32 = ssub.s32 %s19, %s31
      %s33 = ssub.s32 %s20, %s27
      %s34 = sor.u32 %s32, %s33
      %p35 = scmp.eq.s32.totalorder %s34, 0
      %s37 = sadd.s32 %s36, 1
      %s38 = scalar_select %p35, %s36, %s37
      %p41 = pneg %p35
      %p42 = scmp.eq.s32.totalorder %s12, 1
      %p43 = por %p41, %p42
      %p44 = scmp.ne.s32.totalorder %s36, %s39
      %p45 = scmp.eq.s32.totalorder %s12, 0
      %p46 = por %p44, %p45
      %p47 = scmp.ne.s32.totalorder %s36, %s39
      %p48 = scmp.eq.s32.totalorder %s17, 1
      %p49 = por %p47, %p48
      %p50 = scmp.ne.s32.totalorder %s39, %s40
      %p51 = scmp.eq.s32.totalorder %s17, 0
      %p52 = por %p50, %p51
      %p53 = scmp.ne.s32.totalorder %s39, %s40
      %p54 = scmp.eq.s32.totalorder %s18, 1
      %p55 = por %p53, %p54
      %p57 = scmp.ne.s32.totalorder %s40, %s56
      %p58 = scmp.eq.s32.totalorder %s18, 0
      %p59 = por %p57, %p58
      %s60 = ssub.s32 %s19, %s31
      %s61 = ssub.s32 %s20, %s27
      %s62 = sor.u32 %s60, %s61
      %p63 = scmp.eq.s32.totalorder %s62, 0
      %s65 = sadd.s32 %s64, 1
      %s66 = scalar_select %p63, %s64, %s65
      %p69 = pneg %p63
      %p70 = scmp.eq.s32.totalorder %s12, 1
      %p71 = por %p69, %p70
      %p72 = scmp.ne.s32.totalorder %s64, %s67
      %p73 = scmp.eq.s32.totalorder %s12, 0
      %p74 = por %p72, %p73
      %p75 = scmp.ne.s32.totalorder %s64, %s67
      %p76 = scmp.eq.s32.totalorder %s17, 1
      %p77 = por %p75, %p76
      %p78 = scmp.ne.s32.totalorder %s67, %s68
      %p79 = scmp.eq.s32.totalorder %s17, 0
      %p80 = por %p78, %p79
      %p81 = scmp.ne.s32.totalorder %s67, %s68
      %p82 = scmp.eq.s32.totalorder %s18, 1
      %p83 = por %p81, %p82
      %p85 = scmp.ne.s32.totalorder %s68, %s84
      %p86 = scmp.eq.s32.totalorder %s18, 0
      %p87 = por %p85, %p86
      %s88 = ssub.s32 %s19, %s31
      %p89 = scmp.eq.s32.totalorder %s88, 0
      %s91 = sadd.s32 %s90, 1
      %s92 = scalar_select %p89, %s90, %s91
      %p95 = pneg %p89
      %p96 = scmp.eq.s32.totalorder %s12, 1
      %p97 = por %p95, %p96
      %p98 = scmp.ne.s32.totalorder %s90, %s93
      %p99 = scmp.eq.s32.totalorder %s12, 0
      %p100 = por %p98, %p99
      %p101 = scmp.ne.s32.totalorder %s90, %s93
      %p102 = scmp.eq.s32.totalorder %s17, 1
      %p103 = por %p101, %p102
      %p104 = scmp.ne.s32.totalorder %s93, %s94
      %p105 = scmp.eq.s32.totalorder %s17, 0
      %p106 = por %p104, %p105
      %p107 = scmp.ne.s32.totalorder %s93, %s94
      %p108 = scmp.eq.s32.totalorder %s18, 1
      %p109 = por %p107, %p108
      %p111 = scmp.ne.s32.totalorder %s94, %s110
      %p112 = scmp.eq.s32.totalorder %s18, 0
      %p113 = por %p111, %p112
      %s114 = ssub.s32 %s19, %s31
      %p115 = scmp.eq.s32.totalorder %s114, 0
      %s117 = sadd.s32 %s116, 1
      %s118 = scalar_select %p115, %s116, %s117
      %p121 = pneg %p115
      %p122 = scmp.eq.s32.totalorder %s12, 1
      %p123 = por %p121, %p122
      %p124 = scmp.ne.s32.totalorder %s116, %s119
      %p125 = scmp.eq.s32.totalorder %s12, 0
      %p126 = por %p124, %p125
      %p127 = scmp.ne.s32.totalorder %s116, %s119
      %p128 = scmp.eq.s32.totalorder %s17, 1
      %p129 = por %p127, %p128
      %p130 = scmp.ne.s32.totalorder %s119, %s120
      %p131 = scmp.eq.s32.totalorder %s17, 0
      %p132 = por %p130, %p131
      %p133 = scmp.ne.s32.totalorder %s119, %s120
      %p134 = scmp.eq.s32.totalorder %s18, 1
      %p135 = por %p133, %p134
      %p137 = scmp.ne.s32.totalorder %s120, %s136
      %p138 = scmp.eq.s32.totalorder %s18, 0
      %p139 = por %p137, %p138
      %p140 = scmp.le.s32.totalorder 1, %s12
      %p141 = scmp.lt.s32.totalorder %s12, 3
      %p142 = pnand %p140, %p141
      %p143 = pneg %p142
      // Predicated region
      $region9: #{tpu_custom_call.1} parent=5 // pred_check
        _
      $region10: #{tpu_custom_call.1} parent=5 // pred_check_branch
        %145 = sbr.rel (%p142) target = $region12
      $region11: #{tpu_custom_call.1} parent=5 // pred_region
        %s146 = ssub.s32 %s12, 1
      $region12: #{tpu_custom_call.1} parent=5 // pred_fallthru
        _
      %p147 = scmp.lt.s32.totalorder %s12, 2
      // Predicated region
      $region13: #{tpu_custom_call.1} parent=5 // pred_check
        %p148 = pneg %p147
      $region14: #{tpu_custom_call.1} parent=5 // pred_check_branch
        %150 = sbr.rel (%p148) target = $region16
      $region15: #{tpu_custom_call.1} parent=5 // pred_region
        // Predicated region
        $region17: #{tpu_custom_call.1} parent=15 // pred_check
          %p151 = pneg %p46
        $region18: #{tpu_custom_call.1} parent=15 // pred_check_branch
          %153 = sbr.rel (%p151) target = $region20
        $region19: #{tpu_custom_call.1} parent=15 // pred_region
          %s154 = smul.u32 8, %s19
          %s155 = smul.u32 48, %s20
          %p156 = scmp.lt.s32.totalorder %s154, 15
          %s157 = scalar_select %p156, %s154, 15
          %p158 = scmp.lt.s32.totalorder %s155, 47
          %s159 = scalar_select %p158, %s155, 47
          %s160 = smul.addr %s157, 48
          %s161 = sadd.s32 %s159, %s160
          %s162 = smul.addr %s161, 4
          %s163 = scalar_lea.vmem %s0, %s162
          %s164 = smul.u32 8, %s19
          %s165 = smul.u32 48, %s20
        $region20: #{tpu_custom_call.1} parent=15 // pred_fallthru
          _
        // Predicated region
        $region21: #{tpu_custom_call.1} parent=15 // pred_check
          %p166 = pneg %p74
        $region22: #{tpu_custom_call.1} parent=15 // pred_check_branch
          %168 = sbr.rel (%p166) target = $region24
        $region23: #{tpu_custom_call.1} parent=15 // pred_region
          %s169 = smul.u32 8, %s19
          %s170 = smul.u32 3, %s20
          %p171 = scmp.lt.s32.totalorder %s169, 15
          %s172 = scalar_select %p171, %s169, 15
          %p173 = scmp.lt.s32.totalorder %s170, 2
          %s174 = scalar_select %p173, %s170, 2
          %s175 = smul.addr %s172, 3
          %s176 = sadd.s32 %s174, %s175
          %s177 = scalar_lea.vmem %s1, %s176
          %s178 = smul.u32 8, %s19
          %s179 = smul.u32 3, %s20
        $region24: #{tpu_custom_call.1} parent=15 // pred_fallthru
          _
        // Predicated region
        $region25: #{tpu_custom_call.1} parent=15 // pred_check
          %p180 = pneg %p100
        $region26: #{tpu_custom_call.1} parent=15 // pred_check_branch
          %182 = sbr.rel (%p180) target = $region28
        $region27: #{tpu_custom_call.1} parent=15 // pred_region
          %p183 = scmp.lt.s32.totalorder %s19, 1
          %s184 = scalar_select %p183, %s19, 1
          %s185 = smul.addr %s184, 8
          %s186 = scalar_lea.vmem %s2, %s185
        $region28: #{tpu_custom_call.1} parent=15 // pred_fallthru
          _
      $region16: #{tpu_custom_call.1} parent=5 // pred_fallthru
        _
      %p187 = scmp.le.s32.totalorder 1, %s12
      %p188 = scmp.lt.s32.totalorder %s12, 3
      %p189 = pnand %p187, %p188
      %p190 = pneg %p189
      // Predicated region
      $region29: #{tpu_custom_call.1} parent=5 // pred_check
        _
      $region30: #{tpu_custom_call.1} parent=5 // pred_check_branch
        %192 = sbr.rel (%p189) target = $region32
      $region31: #{tpu_custom_call.1} parent=5 // pred_region
        %s193 = ssub.s32 %s12, 1
        %s194 = smul.u32 8, %s21
        %s195 = smul.u32 48, %s22
        %p196 = scmp.lt.s32.totalorder %s194, 15
        %s197 = scalar_select %p196, %s194, 15
        %p198 = scmp.lt.s32.totalorder %s195, 47
        %s199 = scalar_select %p198, %s195, 47
        %s200 = smul.addr %s197, 48
        %s201 = sadd.s32 %s199, %s200
        %s202 = smul.addr %s201, 4
        %s203 = scalar_lea.vmem %s0, %s202
        %p204 = pneg %p52
        %p205 = pneg %p49
        %s206 = smul.u32 8, %s21
        %s207 = smul.u32 3, %s22
        %p208 = scmp.lt.s32.totalorder %s206, 15
        %s209 = scalar_select %p208, %s206, 15
        %p210 = scmp.lt.s32.totalorder %s207, 2
        %s211 = scalar_select %p210, %s207, 2
        %s212 = smul.addr %s209, 3
        %s213 = sadd.s32 %s211, %s212
        %s214 = scalar_lea.vmem %s1, %s213
        %p215 = pneg %p80
        %p216 = pneg %p77
        %p217 = scmp.lt.s32.totalorder %s21, 1
        %s218 = scalar_select %p217, %s21, 1
        %s219 = smul.addr %s218, 8
        %s220 = scalar_lea.vmem %s2, %s219
        %p221 = pneg %p106
        %p222 = pneg %p103
        %p223 = pneg %p132
        %p224 = pneg %p129
        %s225 = sand.u32 %s119, 1
        %s226 = scalar_lea.sflag [#allocation4], %s225
        %s227 = sand.u32 %s119, 1
        %s228 = smul.addr %s227, 8
        %s229 = scalar_lea.vmem [#allocation3], %s228
        %s230 = smul.u32 8, %s21
        %s231 = smul.u32 48, %s22
        %p232 = scmp.lt.s32.totalorder %s230, 15
        %s233 = scalar_select %p232, %s230, 15
        %p234 = scmp.lt.s32.totalorder %s231, 47
        %s235 = scalar_select %p234, %s231, 47
        %s236 = smul.addr %s233, 48
        %s237 = sadd.s32 %s235, %s236
        %s238 = smul.addr %s237, 4
        %s239 = scalar_lea.vmem %s0, %s238
        %s240 = smul.u32 8, %s21
        %s241 = smul.u32 48, %s22
        %s242 = smul.u32 8, %s21
        %s243 = smul.u32 3, %s22
        %p244 = scmp.lt.s32.totalorder %s242, 15
        %s245 = scalar_select %p244, %s242, 15
        %p246 = scmp.lt.s32.totalorder %s243, 2
        %s247 = scalar_select %p246, %s243, 2
        %s248 = smul.addr %s245, 3
        %s249 = sadd.s32 %s247, %s248
        %s250 = scalar_lea.vmem %s1, %s249
        %s251 = smul.u32 8, %s21
        %s252 = smul.u32 3, %s22
        %p253 = scmp.lt.s32.totalorder %s21, 1
        %s254 = scalar_select %p253, %s21, 1
        %s255 = smul.addr %s254, 8
        %s256 = scalar_lea.vmem %s2, %s255
        %p257 = scmp.eq.s32.totalorder %s22, 0
        // Predicated region
        $region33: #{tpu_custom_call.1} parent=31 // pred_check
          %p258 = pneg %p257
        $region34: #{tpu_custom_call.1} parent=31 // pred_check_branch
          %260 = sbr.rel (%p258) target = $region36
        $region35: #{tpu_custom_call.1} parent=31 // pred_region
          %vm261 = vcmask 516096
          %262 = vst.msk [vmem:[#allocation2] sm:$0x1] %vm261, 0.0
          %263 = vst.msk [vmem:[#allocation2 + $0x1] sm:$0x1] %vm261, 0.0
          %264 = vst.msk [vmem:[#allocation2 + $0x2] sm:$0x1] %vm261, 0.0
          %265 = vst.msk [vmem:[#allocation2 + $0x3] sm:$0x1] %vm261, 0.0
          %266 = vst.msk [vmem:[#allocation2 + $0x4] sm:$0x1] %vm261, 0.0
          %267 = vst.msk [vmem:[#allocation2 + $0x5] sm:$0x1] %vm261, 0.0
          %268 = vst.msk [vmem:[#allocation2 + $0x6] sm:$0x1] %vm261, 0.0
          %269 = vst.msk [vmem:[#allocation2 + $0x7] sm:$0x1] %vm261, 0.0
        $region36: #{tpu_custom_call.1} parent=31 // pred_fallthru
          _
        %v270 = vld [vmem:[#allocation2] sm:$0x1]
        %v271 = vld [vmem:[#allocation2 + $0x1] sm:$0x1]
        %v272 = vld [vmem:[#allocation2 + $0x2] sm:$0x1]
        %v273 = vld [vmem:[#allocation2 + $0x3] sm:$0x1]
        %v274 = vld [vmem:[#allocation2 + $0x4] sm:$0x1]
        %v275 = vld [vmem:[#allocation2 + $0x5] sm:$0x1]
        %v276 = vld [vmem:[#allocation2 + $0x6] sm:$0x1]
        %v277 = vld [vmem:[#allocation2 + $0x7] sm:$0x1]
        %v278 = vld [vmem:[%s250] sm:$0x7]
        %v279 = vld [vmem:[%s250 + $0x3] sm:$0x7]
        %v280 = vld [vmem:[%s250 + $0x6] sm:$0x7]
        %v281 = vld [vmem:[%s250 + $0x9] sm:$0x7]
        %v282 = vld [vmem:[%s250 + $0xc] sm:$0x7]
        %v283 = vld [vmem:[%s250 + $0xf] sm:$0x7]
        %v284 = vld [vmem:[%s250 + $0x12] sm:$0x7]
        %v285 = vld [vmem:[%s250 + $0x15] sm:$0x7]
        %v286 = vld [vmem:[%s239] sm:$0xf]
        %v287 = vld [vmem:[%s239 + $0x4] sm:$0xf]
        %v288 = vld [vmem:[%s239 + $0x8] sm:$0xf]
        %v289 = vld [vmem:[%s239 + $0xc] sm:$0xf]
        %v290 = vld [vmem:[%s239 + $0x10] sm:$0xf]
        %v291 = vld [vmem:[%s239 + $0x14] sm:$0xf]
        %v292 = vld [vmem:[%s239 + $0x18] sm:$0xf]
        %v293 = vld [vmem:[%s239 + $0x1c] sm:$0xf]
        %v294 = vld [vmem:[%s239 + $0x20] sm:$0xf]
        %v295 = vld [vmem:[%s239 + $0x24] sm:$0xf]
        %v296 = vld [vmem:[%s239 + $0x28] sm:$0xf]
        %v297 = vld [vmem:[%s239 + $0x2c] sm:$0xf]
        %v298 = vld [vmem:[%s239 + $0x30] sm:$0xf]
        %v299 = vld [vmem:[%s239 + $0x34] sm:$0xf]
        %v300 = vld [vmem:[%s239 + $0x38] sm:$0xf]
        %v301 = vld [vmem:[%s239 + $0x3c] sm:$0xf]
        %v302 = vld [vmem:[%s239 + $0x40] sm:$0xf]
        %v303 = vld [vmem:[%s239 + $0x44] sm:$0xf]
        %v304 = vld [vmem:[%s239 + $0x48] sm:$0xf]
        %v305 = vld [vmem:[%s239 + $0x4c] sm:$0xf]
        %v306 = vld [vmem:[%s239 + $0x50] sm:$0xf]
        %v307 = vld [vmem:[%s239 + $0x54] sm:$0xf]
        %v308 = vld [vmem:[%s239 + $0x58] sm:$0xf]
        %v309 = vld [vmem:[%s239 + $0x5c] sm:$0xf]
        %v310 = vld [vmem:[%s239 + $0x60] sm:$0xf]
        %v311 = vld [vmem:[%s239 + $0x64] sm:$0xf]
        %v312 = vld [vmem:[%s239 + $0x68] sm:$0xf]
        %v313 = vld [vmem:[%s239 + $0x6c] sm:$0xf]
        %v314 = vld [vmem:[%s239 + $0x70] sm:$0xf]
        %v315 = vld [vmem:[%s239 + $0x74] sm:$0xf]
        %v316 = vld [vmem:[%s239 + $0x78] sm:$0xf]
        %v317 = vld [vmem:[%s239 + $0x7c] sm:$0xf]
        %v318 = vld [vmem:[%s239 + $0x80] sm:$0xf]
        %v319 = vld [vmem:[%s239 + $0x84] sm:$0xf]
        %v320 = vld [vmem:[%s239 + $0x88] sm:$0xf]
        %v321 = vld [vmem:[%s239 + $0x8c] sm:$0xf]
        %v322 = vld [vmem:[%s239 + $0x90] sm:$0xf]
        %v323 = vld [vmem:[%s239 + $0x94] sm:$0xf]
        %v324 = vld [vmem:[%s239 + $0x98] sm:$0xf]
        %v325 = vld [vmem:[%s239 + $0x9c] sm:$0xf]
        %v326 = vld [vmem:[%s239 + $0xa0] sm:$0xf]
        %v327 = vld [vmem:[%s239 + $0xa4] sm:$0xf]
        %v328 = vld [vmem:[%s239 + $0xa8] sm:$0xf]
        %v329 = vld [vmem:[%s239 + $0xac] sm:$0xf]
        %v330 = vld [vmem:[%s239 + $0xb0] sm:$0xf]
        %v331 = vld [vmem:[%s239 + $0xb4] sm:$0xf]
        %v332 = vld [vmem:[%s239 + $0xb8] sm:$0xf]
        %v333 = vld [vmem:[%s239 + $0xbc] sm:$0xf]
        %v334 = vld [vmem:[%s239 + $0xc0] sm:$0xf]
        %v335 = vld [vmem:[%s239 + $0xc4] sm:$0xf]
        %v336 = vld [vmem:[%s239 + $0xc8] sm:$0xf]
        %v337 = vld [vmem:[%s239 + $0xcc] sm:$0xf]
        %v338 = vld [vmem:[%s239 + $0xd0] sm:$0xf]
        %v339 = vld [vmem:[%s239 + $0xd4] sm:$0xf]
        %v340 = vld [vmem:[%s239 + $0xd8] sm:$0xf]
        %v341 = vld [vmem:[%s239 + $0xdc] sm:$0xf]
        %v342 = vld [vmem:[%s239 + $0xe0] sm:$0xf]
        %v343 = vld [vmem:[%s239 + $0xe4] sm:$0xf]
        %v344 = vld [vmem:[%s239 + $0xe8] sm:$0xf]
        %v345 = vld [vmem:[%s239 + $0xec] sm:$0xf]
        %v346 = vld [vmem:[%s239 + $0xf0] sm:$0xf]
        %v347 = vld [vmem:[%s239 + $0xf4] sm:$0xf]
        %v348 = vld [vmem:[%s239 + $0xf8] sm:$0xf]
        %v349 = vld [vmem:[%s239 + $0xfc] sm:$0xf]
        %v350 = vld [vmem:[%s239 + $0x100] sm:$0xf]
        %v351 = vld [vmem:[%s239 + $0x104] sm:$0xf]
        %v352 = vld [vmem:[%s239 + $0x108] sm:$0xf]
        %v353 = vld [vmem:[%s239 + $0x10c] sm:$0xf]
        %v354 = vld [vmem:[%s239 + $0x110] sm:$0xf]
        %v355 = vld [vmem:[%s239 + $0x114] sm:$0xf]
        %v356 = vld [vmem:[%s239 + $0x118] sm:$0xf]
        %v357 = vld [vmem:[%s239 + $0x11c] sm:$0xf]
        %v358 = vld [vmem:[%s239 + $0x120] sm:$0xf]
        %v359 = vld [vmem:[%s239 + $0x124] sm:$0xf]
        %v360 = vld [vmem:[%s239 + $0x128] sm:$0xf]
        %v361 = vld [vmem:[%s239 + $0x12c] sm:$0xf]
        %v362 = vld [vmem:[%s239 + $0x130] sm:$0xf]
        %v363 = vld [vmem:[%s239 + $0x134] sm:$0xf]
        %v364 = vld [vmem:[%s239 + $0x138] sm:$0xf]
        %v365 = vld [vmem:[%s239 + $0x13c] sm:$0xf]
        %v366 = vld [vmem:[%s239 + $0x140] sm:$0xf]
        %v367 = vld [vmem:[%s239 + $0x144] sm:$0xf]
        %v368 = vld [vmem:[%s239 + $0x148] sm:$0xf]
        %v369 = vld [vmem:[%s239 + $0x14c] sm:$0xf]
        %v370 = vld [vmem:[%s239 + $0x150] sm:$0xf]
        %v371 = vld [vmem:[%s239 + $0x154] sm:$0xf]
        %v372 = vld [vmem:[%s239 + $0x158] sm:$0xf]
        %v373 = vld [vmem:[%s239 + $0x15c] sm:$0xf]
        %v374 = vld [vmem:[%s239 + $0x160] sm:$0xf]
        %v375 = vld [vmem:[%s239 + $0x164] sm:$0xf]
        %v376 = vld [vmem:[%s239 + $0x168] sm:$0xf]
        %v377 = vld [vmem:[%s239 + $0x16c] sm:$0xf]
        %v378 = vld [vmem:[%s239 + $0x170] sm:$0xf]
        %v379 = vld [vmem:[%s239 + $0x174] sm:$0xf]
        %v380 = vld [vmem:[%s239 + $0x178] sm:$0xf]
        %v381 = vld [vmem:[%s239 + $0x17c] sm:$0xf]
        %v382 = vld [vmem:[%s239 + $0x180] sm:$0xf]
        %v383 = vld [vmem:[%s239 + $0x184] sm:$0xf]
        %v384 = vld [vmem:[%s239 + $0x188] sm:$0xf]
        %v385 = vld [vmem:[%s239 + $0x18c] sm:$0xf]
        %v386 = vld [vmem:[%s239 + $0x190] sm:$0xf]
        %v387 = vld [vmem:[%s239 + $0x194] sm:$0xf]
        %v388 = vld [vmem:[%s239 + $0x198] sm:$0xf]
        %v389 = vld [vmem:[%s239 + $0x19c] sm:$0xf]
        %v390 = vld [vmem:[%s239 + $0x1a0] sm:$0xf]
        %v391 = vld [vmem:[%s239 + $0x1a4] sm:$0xf]
        %v392 = vld [vmem:[%s239 + $0x1a8] sm:$0xf]
        %v393 = vld [vmem:[%s239 + $0x1ac] sm:$0xf]
        %v394 = vld [vmem:[%s239 + $0x1b0] sm:$0xf]
        %v395 = vld [vmem:[%s239 + $0x1b4] sm:$0xf]
        %v396 = vld [vmem:[%s239 + $0x1b8] sm:$0xf]
        %v397 = vld [vmem:[%s239 + $0x1bc] sm:$0xf]
        %v398 = vld [vmem:[%s239 + $0x1c0] sm:$0xf]
        %v399 = vld [vmem:[%s239 + $0x1c4] sm:$0xf]
        %v400 = vld [vmem:[%s239 + $0x1c8] sm:$0xf]
        %v401 = vld [vmem:[%s239 + $0x1cc] sm:$0xf]
        %v402 = vld [vmem:[%s239 + $0x1d0] sm:$0xf]
        %v403 = vld [vmem:[%s239 + $0x1d4] sm:$0xf]
        %v404 = vld [vmem:[%s239 + $0x1d8] sm:$0xf]
        %v405 = vld [vmem:[%s239 + $0x1dc] sm:$0xf]
        %v406 = vld [vmem:[%s239 + $0x1e0] sm:$0xf]
        %v407 = vld [vmem:[%s239 + $0x1e4] sm:$0xf]
        %v408 = vld [vmem:[%s239 + $0x1e8] sm:$0xf]
        %v409 = vld [vmem:[%s239 + $0x1ec] sm:$0xf]
        %v410 = vld [vmem:[%s239 + $0x1f0] sm:$0xf]
        %v411 = vld [vmem:[%s239 + $0x1f4] sm:$0xf]
        %v412 = vld [vmem:[%s239 + $0x1f8] sm:$0xf]
        %v413 = vld [vmem:[%s239 + $0x1fc] sm:$0xf]
        %v414 = vld [vmem:[%s239 + $0x200] sm:$0xf]
        %v415 = vld [vmem:[%s239 + $0x204] sm:$0xf]
        %v416 = vld [vmem:[%s239 + $0x208] sm:$0xf]
        %v417 = vld [vmem:[%s239 + $0x20c] sm:$0xf]
        %v418 = vld [vmem:[%s239 + $0x210] sm:$0xf]
        %v419 = vld [vmem:[%s239 + $0x214] sm:$0xf]
        %v420 = vld [vmem:[%s239 + $0x218] sm:$0xf]
        %v421 = vld [vmem:[%s239 + $0x21c] sm:$0xf]
        %v422 = vld [vmem:[%s239 + $0x220] sm:$0xf]
        %v423 = vld [vmem:[%s239 + $0x224] sm:$0xf]
        %v424 = vld [vmem:[%s239 + $0x228] sm:$0xf]
        %v425 = vld [vmem:[%s239 + $0x22c] sm:$0xf]
        %v426 = vld [vmem:[%s239 + $0x230] sm:$0xf]
        %v427 = vld [vmem:[%s239 + $0x234] sm:$0xf]
        %v428 = vld [vmem:[%s239 + $0x238] sm:$0xf]
        %v429 = vld [vmem:[%s239 + $0x23c] sm:$0xf]
        %v430 = vld [vmem:[%s239 + $0x240] sm:$0xf]
        %v431 = vld [vmem:[%s239 + $0x244] sm:$0xf]
        %v432 = vld [vmem:[%s239 + $0x248] sm:$0xf]
        %v433 = vld [vmem:[%s239 + $0x24c] sm:$0xf]
        %v434 = vld [vmem:[%s239 + $0x250] sm:$0xf]
        %v435 = vld [vmem:[%s239 + $0x254] sm:$0xf]
        %v436 = vld [vmem:[%s239 + $0x258] sm:$0xf]
        %v437 = vld [vmem:[%s239 + $0x25c] sm:$0xf]
        %v438 = vld [vmem:[%s239 + $0x260] sm:$0xf]
        %v439 = vld [vmem:[%s239 + $0x264] sm:$0xf]
        %v440 = vld [vmem:[%s239 + $0x268] sm:$0xf]
        %v441 = vld [vmem:[%s239 + $0x26c] sm:$0xf]
        %v442 = vld [vmem:[%s239 + $0x270] sm:$0xf]
        %v443 = vld [vmem:[%s239 + $0x274] sm:$0xf]
        %v444 = vld [vmem:[%s239 + $0x278] sm:$0xf]
        %v445 = vld [vmem:[%s239 + $0x27c] sm:$0xf]
        %v446 = vld [vmem:[%s239 + $0x280] sm:$0xf]
        %v447 = vld [vmem:[%s239 + $0x284] sm:$0xf]
        %v448 = vld [vmem:[%s239 + $0x288] sm:$0xf]
        %v449 = vld [vmem:[%s239 + $0x28c] sm:$0xf]
        %v450 = vld [vmem:[%s239 + $0x290] sm:$0xf]
        %v451 = vld [vmem:[%s239 + $0x294] sm:$0xf]
        %v452 = vld [vmem:[%s239 + $0x298] sm:$0xf]
        %v453 = vld [vmem:[%s239 + $0x29c] sm:$0xf]
        %v454 = vld [vmem:[%s239 + $0x2a0] sm:$0xf]
        %v455 = vld [vmem:[%s239 + $0x2a4] sm:$0xf]
        %v456 = vld [vmem:[%s239 + $0x2a8] sm:$0xf]
        %v457 = vld [vmem:[%s239 + $0x2ac] sm:$0xf]
        %v458 = vld [vmem:[%s239 + $0x2b0] sm:$0xf]
        %v459 = vld [vmem:[%s239 + $0x2b4] sm:$0xf]
        %v460 = vld [vmem:[%s239 + $0x2b8] sm:$0xf]
        %v461 = vld [vmem:[%s239 + $0x2bc] sm:$0xf]
        %v462 = vld [vmem:[%s239 + $0x2c0] sm:$0xf]
        %v463 = vld [vmem:[%s239 + $0x2c4] sm:$0xf]
        %v464 = vld [vmem:[%s239 + $0x2c8] sm:$0xf]
        %v465 = vld [vmem:[%s239 + $0x2cc] sm:$0xf]
        %v466 = vld [vmem:[%s239 + $0x2d0] sm:$0xf]
        %v467 = vld [vmem:[%s239 + $0x2d4] sm:$0xf]
        %v468 = vld [vmem:[%s239 + $0x2d8] sm:$0xf]
        %v469 = vld [vmem:[%s239 + $0x2dc] sm:$0xf]
        %v470 = vld [vmem:[%s239 + $0x2e0] sm:$0xf]
        %v471 = vld [vmem:[%s239 + $0x2e4] sm:$0xf]
        %v472 = vld [vmem:[%s239 + $0x2e8] sm:$0xf]
        %v473 = vld [vmem:[%s239 + $0x2ec] sm:$0xf]
        %v474 = vld [vmem:[%s239 + $0x2f0] sm:$0xf]
        %v475 = vld [vmem:[%s239 + $0x2f4] sm:$0xf]
        %v476 = vld [vmem:[%s239 + $0x2f8] sm:$0xf]
        %v477 = vld [vmem:[%s239 + $0x2fc] sm:$0xf]
        %v478 = vld [vmem:[%s239 + $0x300] sm:$0xf]
        %v479 = vld [vmem:[%s239 + $0x304] sm:$0xf]
        %v480 = vld [vmem:[%s239 + $0x308] sm:$0xf]
        %v481 = vld [vmem:[%s239 + $0x30c] sm:$0xf]
        %v482 = vld [vmem:[%s239 + $0x310] sm:$0xf]
        %v483 = vld [vmem:[%s239 + $0x314] sm:$0xf]
        %v484 = vld [vmem:[%s239 + $0x318] sm:$0xf]
        %v485 = vld [vmem:[%s239 + $0x31c] sm:$0xf]
        %v486 = vld [vmem:[%s239 + $0x320] sm:$0xf]
        %v487 = vld [vmem:[%s239 + $0x324] sm:$0xf]
        %v488 = vld [vmem:[%s239 + $0x328] sm:$0xf]
        %v489 = vld [vmem:[%s239 + $0x32c] sm:$0xf]
        %v490 = vld [vmem:[%s239 + $0x330] sm:$0xf]
        %v491 = vld [vmem:[%s239 + $0x334] sm:$0xf]
        %v492 = vld [vmem:[%s239 + $0x338] sm:$0xf]
        %v493 = vld [vmem:[%s239 + $0x33c] sm:$0xf]
        %v494 = vld [vmem:[%s239 + $0x340] sm:$0xf]
        %v495 = vld [vmem:[%s239 + $0x344] sm:$0xf]
        %v496 = vld [vmem:[%s239 + $0x348] sm:$0xf]
        %v497 = vld [vmem:[%s239 + $0x34c] sm:$0xf]
        %v498 = vld [vmem:[%s239 + $0x350] sm:$0xf]
        %v499 = vld [vmem:[%s239 + $0x354] sm:$0xf]
        %v500 = vld [vmem:[%s239 + $0x358] sm:$0xf]
        %v501 = vld [vmem:[%s239 + $0x35c] sm:$0xf]
        %v502 = vld [vmem:[%s239 + $0x360] sm:$0xf]
        %v503 = vld [vmem:[%s239 + $0x364] sm:$0xf]
        %v504 = vld [vmem:[%s239 + $0x368] sm:$0xf]
        %v505 = vld [vmem:[%s239 + $0x36c] sm:$0xf]
        %v506 = vld [vmem:[%s239 + $0x370] sm:$0xf]
        %v507 = vld [vmem:[%s239 + $0x374] sm:$0xf]
        %v508 = vld [vmem:[%s239 + $0x378] sm:$0xf]
        %v509 = vld [vmem:[%s239 + $0x37c] sm:$0xf]
        %v510 = vld [vmem:[%s239 + $0x380] sm:$0xf]
        %v511 = vld [vmem:[%s239 + $0x384] sm:$0xf]
        %v512 = vld [vmem:[%s239 + $0x388] sm:$0xf]
        %v513 = vld [vmem:[%s239 + $0x38c] sm:$0xf]
        %v514 = vld [vmem:[%s239 + $0x390] sm:$0xf]
        %v515 = vld [vmem:[%s239 + $0x394] sm:$0xf]
        %v516 = vld [vmem:[%s239 + $0x398] sm:$0xf]
        %v517 = vld [vmem:[%s239 + $0x39c] sm:$0xf]
        %v518 = vld [vmem:[%s239 + $0x3a0] sm:$0xf]
        %v519 = vld [vmem:[%s239 + $0x3a4] sm:$0xf]
        %v520 = vld [vmem:[%s239 + $0x3a8] sm:$0xf]
        %v521 = vld [vmem:[%s239 + $0x3ac] sm:$0xf]
        %v522 = vld [vmem:[%s239 + $0x3b0] sm:$0xf]
        %v523 = vld [vmem:[%s239 + $0x3b4] sm:$0xf]
        %v524 = vld [vmem:[%s239 + $0x3b8] sm:$0xf]
        %v525 = vld [vmem:[%s239 + $0x3bc] sm:$0xf]
        %v526 = vld [vmem:[%s239 + $0x3c0] sm:$0xf]
        %v527 = vld [vmem:[%s239 + $0x3c4] sm:$0xf]
        %v528 = vld [vmem:[%s239 + $0x3c8] sm:$0xf]
        %v529 = vld [vmem:[%s239 + $0x3cc] sm:$0xf]
        %v530 = vld [vmem:[%s239 + $0x3d0] sm:$0xf]
        %v531 = vld [vmem:[%s239 + $0x3d4] sm:$0xf]
        %v532 = vld [vmem:[%s239 + $0x3d8] sm:$0xf]
        %v533 = vld [vmem:[%s239 + $0x3dc] sm:$0xf]
        %v534 = vld [vmem:[%s239 + $0x3e0] sm:$0xf]
        %v535 = vld [vmem:[%s239 + $0x3e4] sm:$0xf]
        %v536 = vld [vmem:[%s239 + $0x3e8] sm:$0xf]
        %v537 = vld [vmem:[%s239 + $0x3ec] sm:$0xf]
        %v538 = vld [vmem:[%s239 + $0x3f0] sm:$0xf]
        %v539 = vld [vmem:[%s239 + $0x3f4] sm:$0xf]
        %v540 = vld [vmem:[%s239 + $0x3f8] sm:$0xf]
        %v541 = vld [vmem:[%s239 + $0x3fc] sm:$0xf]
        %v542 = vld [vmem:[%s239 + $0x400] sm:$0xf]
        %v543 = vld [vmem:[%s239 + $0x404] sm:$0xf]
        %v544 = vld [vmem:[%s239 + $0x408] sm:$0xf]
        %v545 = vld [vmem:[%s239 + $0x40c] sm:$0xf]
        %v546 = vld [vmem:[%s239 + $0x410] sm:$0xf]
        %v547 = vld [vmem:[%s239 + $0x414] sm:$0xf]
        %v548 = vld [vmem:[%s239 + $0x418] sm:$0xf]
        %v549 = vld [vmem:[%s239 + $0x41c] sm:$0xf]
        %v550 = vld [vmem:[%s239 + $0x420] sm:$0xf]
        %v551 = vld [vmem:[%s239 + $0x424] sm:$0xf]
        %v552 = vld [vmem:[%s239 + $0x428] sm:$0xf]
        %v553 = vld [vmem:[%s239 + $0x42c] sm:$0xf]
        %v554 = vld [vmem:[%s239 + $0x430] sm:$0xf]
        %v555 = vld [vmem:[%s239 + $0x434] sm:$0xf]
        %v556 = vld [vmem:[%s239 + $0x438] sm:$0xf]
        %v557 = vld [vmem:[%s239 + $0x43c] sm:$0xf]
        %v558 = vld [vmem:[%s239 + $0x440] sm:$0xf]
        %v559 = vld [vmem:[%s239 + $0x444] sm:$0xf]
        %v560 = vld [vmem:[%s239 + $0x448] sm:$0xf]
        %v561 = vld [vmem:[%s239 + $0x44c] sm:$0xf]
        %v562 = vld [vmem:[%s239 + $0x450] sm:$0xf]
        %v563 = vld [vmem:[%s239 + $0x454] sm:$0xf]
        %v564 = vld [vmem:[%s239 + $0x458] sm:$0xf]
        %v565 = vld [vmem:[%s239 + $0x45c] sm:$0xf]
        %v566 = vld [vmem:[%s239 + $0x460] sm:$0xf]
        %v567 = vld [vmem:[%s239 + $0x464] sm:$0xf]
        %v568 = vld [vmem:[%s239 + $0x468] sm:$0xf]
        %v569 = vld [vmem:[%s239 + $0x46c] sm:$0xf]
        %v570 = vld [vmem:[%s239 + $0x470] sm:$0xf]
        %v571 = vld [vmem:[%s239 + $0x474] sm:$0xf]
        %v572 = vld [vmem:[%s239 + $0x478] sm:$0xf]
        %v573 = vld [vmem:[%s239 + $0x47c] sm:$0xf]
        %v574 = vld [vmem:[%s239 + $0x480] sm:$0xf]
        %v575 = vld [vmem:[%s239 + $0x484] sm:$0xf]
        %v576 = vld [vmem:[%s239 + $0x488] sm:$0xf]
        %v577 = vld [vmem:[%s239 + $0x48c] sm:$0xf]
        %v578 = vld [vmem:[%s239 + $0x490] sm:$0xf]
        %v579 = vld [vmem:[%s239 + $0x494] sm:$0xf]
        %v580 = vld [vmem:[%s239 + $0x498] sm:$0xf]
        %v581 = vld [vmem:[%s239 + $0x49c] sm:$0xf]
        %v582 = vld [vmem:[%s239 + $0x4a0] sm:$0xf]
        %v583 = vld [vmem:[%s239 + $0x4a4] sm:$0xf]
        %v584 = vld [vmem:[%s239 + $0x4a8] sm:$0xf]
        %v585 = vld [vmem:[%s239 + $0x4ac] sm:$0xf]
        %v586 = vld [vmem:[%s239 + $0x4b0] sm:$0xf]
        %v587 = vld [vmem:[%s239 + $0x4b4] sm:$0xf]
        %v588 = vld [vmem:[%s239 + $0x4b8] sm:$0xf]
        %v589 = vld [vmem:[%s239 + $0x4bc] sm:$0xf]
        %v590 = vld [vmem:[%s239 + $0x4c0] sm:$0xf]
        %v591 = vld [vmem:[%s239 + $0x4c4] sm:$0xf]
        %v592 = vld [vmem:[%s239 + $0x4c8] sm:$0xf]
        %v593 = vld [vmem:[%s239 + $0x4cc] sm:$0xf]
        %v594 = vld [vmem:[%s239 + $0x4d0] sm:$0xf]
        %v595 = vld [vmem:[%s239 + $0x4d4] sm:$0xf]
        %v596 = vld [vmem:[%s239 + $0x4d8] sm:$0xf]
        %v597 = vld [vmem:[%s239 + $0x4dc] sm:$0xf]
        %v598 = vld [vmem:[%s239 + $0x4e0] sm:$0xf]
        %v599 = vld [vmem:[%s239 + $0x4e4] sm:$0xf]
        %v600 = vld [vmem:[%s239 + $0x4e8] sm:$0xf]
        %v601 = vld [vmem:[%s239 + $0x4ec] sm:$0xf]
        %v602 = vld [vmem:[%s239 + $0x4f0] sm:$0xf]
        %v603 = vld [vmem:[%s239 + $0x4f4] sm:$0xf]
        %v604 = vld [vmem:[%s239 + $0x4f8] sm:$0xf]
        %v605 = vld [vmem:[%s239 + $0x4fc] sm:$0xf]
        %v606 = vld [vmem:[%s239 + $0x500] sm:$0xf]
        %v607 = vld [vmem:[%s239 + $0x504] sm:$0xf]
        %v608 = vld [vmem:[%s239 + $0x508] sm:$0xf]
        %v609 = vld [vmem:[%s239 + $0x50c] sm:$0xf]
        %v610 = vld [vmem:[%s239 + $0x510] sm:$0xf]
        %v611 = vld [vmem:[%s239 + $0x514] sm:$0xf]
        %v612 = vld [vmem:[%s239 + $0x518] sm:$0xf]
        %v613 = vld [vmem:[%s239 + $0x51c] sm:$0xf]
        %v614 = vld [vmem:[%s239 + $0x520] sm:$0xf]
        %v615 = vld [vmem:[%s239 + $0x524] sm:$0xf]
        %v616 = vld [vmem:[%s239 + $0x528] sm:$0xf]
        %v617 = vld [vmem:[%s239 + $0x52c] sm:$0xf]
        %v618 = vld [vmem:[%s239 + $0x530] sm:$0xf]
        %v619 = vld [vmem:[%s239 + $0x534] sm:$0xf]
        %v620 = vld [vmem:[%s239 + $0x538] sm:$0xf]
        %v621 = vld [vmem:[%s239 + $0x53c] sm:$0xf]
        %v622 = vld [vmem:[%s239 + $0x540] sm:$0xf]
        %v623 = vld [vmem:[%s239 + $0x544] sm:$0xf]
        %v624 = vld [vmem:[%s239 + $0x548] sm:$0xf]
        %v625 = vld [vmem:[%s239 + $0x54c] sm:$0xf]
        %v626 = vld [vmem:[%s239 + $0x550] sm:$0xf]
        %v627 = vld [vmem:[%s239 + $0x554] sm:$0xf]
        %v628 = vld [vmem:[%s239 + $0x558] sm:$0xf]
        %v629 = vld [vmem:[%s239 + $0x55c] sm:$0xf]
        %v630 = vld [vmem:[%s239 + $0x560] sm:$0xf]
        %v631 = vld [vmem:[%s239 + $0x564] sm:$0xf]
        %v632 = vld [vmem:[%s239 + $0x568] sm:$0xf]
        %v633 = vld [vmem:[%s239 + $0x56c] sm:$0xf]
        %v634 = vld [vmem:[%s239 + $0x570] sm:$0xf]
        %v635 = vld [vmem:[%s239 + $0x574] sm:$0xf]
        %v636 = vld [vmem:[%s239 + $0x578] sm:$0xf]
        %v637 = vld [vmem:[%s239 + $0x57c] sm:$0xf]
        %v638 = vld [vmem:[%s239 + $0x580] sm:$0xf]
        %v639 = vld [vmem:[%s239 + $0x584] sm:$0xf]
        %v640 = vld [vmem:[%s239 + $0x588] sm:$0xf]
        %v641 = vld [vmem:[%s239 + $0x58c] sm:$0xf]
        %v642 = vld [vmem:[%s239 + $0x590] sm:$0xf]
        %v643 = vld [vmem:[%s239 + $0x594] sm:$0xf]
        %v644 = vld [vmem:[%s239 + $0x598] sm:$0xf]
        %v645 = vld [vmem:[%s239 + $0x59c] sm:$0xf]
        %v646 = vld [vmem:[%s239 + $0x5a0] sm:$0xf]
        %v647 = vld [vmem:[%s239 + $0x5a4] sm:$0xf]
        %v648 = vld [vmem:[%s239 + $0x5a8] sm:$0xf]
        %v649 = vld [vmem:[%s239 + $0x5ac] sm:$0xf]
        %v650 = vld [vmem:[%s239 + $0x5b0] sm:$0xf]
        %v651 = vld [vmem:[%s239 + $0x5b4] sm:$0xf]
        %v652 = vld [vmem:[%s239 + $0x5b8] sm:$0xf]
        %v653 = vld [vmem:[%s239 + $0x5bc] sm:$0xf]
        %v654 = vld [vmem:[%s239 + $0x5c0] sm:$0xf]
        %v655 = vld [vmem:[%s239 + $0x5c4] sm:$0xf]
        %v656 = vld [vmem:[%s239 + $0x5c8] sm:$0xf]
        %v657 = vld [vmem:[%s239 + $0x5cc] sm:$0xf]
        %v658 = vld [vmem:[%s239 + $0x5d0] sm:$0xf]
        %v659 = vld [vmem:[%s239 + $0x5d4] sm:$0xf]
        %v660 = vld [vmem:[%s239 + $0x5d8] sm:$0xf]
        %v661 = vld [vmem:[%s239 + $0x5dc] sm:$0xf]
        %v662 = vld [vmem:[%s239 + $0x5e0] sm:$0xf]
        %v663 = vld [vmem:[%s239 + $0x5e4] sm:$0xf]
        %v664 = vld [vmem:[%s239 + $0x5e8] sm:$0xf]
        %v665 = vld [vmem:[%s239 + $0x5ec] sm:$0xf]
        %v666 = vld [vmem:[%s239 + $0x5f0] sm:$0xf]
        %v667 = vld [vmem:[%s239 + $0x5f4] sm:$0xf]
        %v668 = vld [vmem:[%s239 + $0x5f8] sm:$0xf]
        %v669 = vld [vmem:[%s239 + $0x5fc] sm:$0xf]
        %671 = vst [vmem:[#allocation1] ss:$9 sm:$0xff] %v278
        %v672 = vld [vmem:[#allocation1] sm:$0xff]
        %v673 = vld [vmem:[#allocation1 + $0x9] sm:$0xff]
        %v674 = vld [vmem:[#allocation1 + $0x12] sm:$0xff]
        %v726 = vunpack.c.l.b16 %v286
        %v727 = vunpack.c.l.b16 %v287
        %v728 = vunpack.c.l.b16 %v288
        %v729 = vunpack.c.l.b16 %v289
        %v730 = vunpack.c.l.b16 %v290
        %v731 = vunpack.c.l.b16 %v291
        %v732 = vunpack.c.l.b16 %v292
        %v733 = vunpack.c.l.b16 %v293
        %v734 = vunpack.c.l.b16 %v294
        %v735 = vunpack.c.l.b16 %v295
        %v736 = vunpack.c.l.b16 %v296
        %v737 = vunpack.c.l.b16 %v297
        %v738 = vunpack.c.l.b16 %v298
        %v739 = vunpack.c.l.b16 %v299
        %v740 = vunpack.c.l.b16 %v300
        %v741 = vunpack.c.l.b16 %v301
        %v742 = vunpack.c.l.b16 %v302
        %v743 = vunpack.c.l.b16 %v303
        %v744 = vunpack.c.l.b16 %v304
        %v745 = vunpack.c.l.b16 %v305
        %v746 = vunpack.c.l.b16 %v306
        %v747 = vunpack.c.l.b16 %v307
        %v748 = vunpack.c.l.b16 %v308
        %v749 = vunpack.c.l.b16 %v309
        %v750 = vunpack.c.l.b16 %v310
        %v751 = vunpack.c.l.b16 %v311
        %v752 = vunpack.c.l.b16 %v312
        %v753 = vunpack.c.l.b16 %v313
        %v754 = vunpack.c.l.b16 %v314
        %v755 = vunpack.c.l.b16 %v315
        %v756 = vunpack.c.l.b16 %v316
        %v757 = vunpack.c.l.b16 %v317
        %v758 = vunpack.c.l.b16 %v318
        %v759 = vunpack.c.l.b16 %v319
        %v760 = vunpack.c.l.b16 %v320
        %v761 = vunpack.c.l.b16 %v321
        %v762 = vunpack.c.l.b16 %v322
        %v763 = vunpack.c.l.b16 %v323
        %v764 = vunpack.c.l.b16 %v324
        %v765 = vunpack.c.l.b16 %v325
        %v766 = vunpack.c.l.b16 %v326
        %v767 = vunpack.c.l.b16 %v327
        %v768 = vunpack.c.l.b16 %v328
        %v769 = vunpack.c.l.b16 %v329
        %v770 = vunpack.c.l.b16 %v330
        %v771 = vunpack.c.l.b16 %v331
        %v772 = vunpack.c.l.b16 %v332
        %v773 = vunpack.c.l.b16 %v333
        %v774 = vpack.c.b16 %v727, %v726
        %v775 = vpack.c.b16 %v729, %v728
        %v776 = vpack.c.b16 %v731, %v730
        %v777 = vpack.c.b16 %v733, %v732
        %v778 = vpack.c.b16 %v735, %v734
        %v779 = vpack.c.b16 %v737, %v736
        %v780 = vpack.c.b16 %v739, %v738
        %v781 = vpack.c.b16 %v741, %v740
        %v782 = vpack.c.b16 %v743, %v742
        %v783 = vpack.c.b16 %v745, %v744
        %v784 = vpack.c.b16 %v747, %v746
        %v785 = vpack.c.b16 %v749, %v748
        %v786 = vpack.c.b16 %v751, %v750
        %v787 = vpack.c.b16 %v753, %v752
        %v788 = vpack.c.b16 %v755, %v754
        %v789 = vpack.c.b16 %v757, %v756
        %v790 = vpack.c.b16 %v759, %v758
        %v791 = vpack.c.b16 %v761, %v760
        %v792 = vpack.c.b16 %v763, %v762
        %v793 = vpack.c.b16 %v765, %v764
        %v794 = vpack.c.b16 %v767, %v766
        %v795 = vpack.c.b16 %v769, %v768
        %v796 = vpack.c.b16 %v771, %v770
        %v797 = vpack.c.b16 %v773, %v772
        %822 = vmatpush.bf16.msra.mxu0 %v781
        %823 = vmatpush.bf16.msra.mxu0 %v780
        %824 = vmatpush.bf16.msra.mxu0 %v779
        %825 = vmatpush.bf16.msra.mxu0 %v778
        %826 = vmatpush.bf16.msra.mxu0 %v777
        %827 = vmatpush.bf16.msra.mxu0 %v776
        %828 = vmatpush.bf16.msra.mxu0 %v775
        %829 = vmatpush.bf16.msra.mxu0 %v774
        %830 = vmatmul.bf16.gmra.mxu0 %v672
        %v831 = vpop.f32.mrf.mxu0
        %v832 = vadd.f32 0.0, %v831
        %v833 = vpop.f32.mrf.mxu0
        %834 = vdwg.mxu0
        %835 = vmatpush.bf16.msra.mxu0 %v789
        %836 = vmatpush.bf16.msra.mxu0 %v788
        %837 = vmatpush.bf16.msra.mxu0 %v787
        %838 = vmatpush.bf16.msra.mxu0 %v786
        %839 = vmatpush.bf16.msra.mxu0 %v785
        %840 = vmatpush.bf16.msra.mxu0 %v784
        %841 = vmatpush.bf16.msra.mxu0 %v783
        %842 = vmatpush.bf16.msra.mxu0 %v782
        %843 = vmatmul.bf16.gmra.mxu0 %v673
        %v844 = vpop.f32.mrf.mxu0
        %v845 = vadd.f32 %v832, %v844
        %v846 = vpop.f32.mrf.mxu0
        %847 = vdwg.mxu0
        %848 = vmatpush.bf16.msra.mxu0 %v797
        %849 = vmatpush.bf16.msra.mxu0 %v796
        %850 = vmatpush.bf16.msra.mxu0 %v795
        %851 = vmatpush.bf16.msra.mxu0 %v794
        %852 = vmatpush.bf16.msra.mxu0 %v793
        %853 = vmatpush.bf16.msra.mxu0 %v792
        %854 = vmatpush.bf16.msra.mxu0 %v791
        %855 = vmatpush.bf16.msra.mxu0 %v790
        %856 = vmatmul.bf16.gmra.mxu0 %v674
        %v857 = vpop.f32.mrf.mxu0
        %v858 = vadd.f32 %v845, %v857
        %v859 = vpop.f32.mrf.mxu0
        %860 = vdwg.mxu0
        %862 = vst [vmem:[#allocation1] ss:$9 sm:$0xff] %v279
        %v863 = vld [vmem:[#allocation1] sm:$0xff]
        %v864 = vld [vmem:[#allocation1 + $0x9] sm:$0xff]
        %v865 = vld [vmem:[#allocation1 + $0x12] sm:$0xff]
        %v917 = vunpack.c.l.b16 %v334
        %v918 = vunpack.c.l.b16 %v335
        %v919 = vunpack.c.l.b16 %v336
        %v920 = vunpack.c.l.b16 %v337
        %v921 = vunpack.c.l.b16 %v338
        %v922 = vunpack.c.l.b16 %v339
        %v923 = vunpack.c.l.b16 %v340
        %v924 = vunpack.c.l.b16 %v341
        %v925 = vunpack.c.l.b16 %v342
        %v926 = vunpack.c.l.b16 %v343
        %v927 = vunpack.c.l.b16 %v344
        %v928 = vunpack.c.l.b16 %v345
        %v929 = vunpack.c.l.b16 %v346
        %v930 = vunpack.c.l.b16 %v347
        %v931 = vunpack.c.l.b16 %v348
        %v932 = vunpack.c.l.b16 %v349
        %v933 = vunpack.c.l.b16 %v350
        %v934 = vunpack.c.l.b16 %v351
        %v935 = vunpack.c.l.b16 %v352
        %v936 = vunpack.c.l.b16 %v353
        %v937 = vunpack.c.l.b16 %v354
        %v938 = vunpack.c.l.b16 %v355
        %v939 = vunpack.c.l.b16 %v356
        %v940 = vunpack.c.l.b16 %v357
        %v941 = vunpack.c.l.b16 %v358
        %v942 = vunpack.c.l.b16 %v359
        %v943 = vunpack.c.l.b16 %v360
        %v944 = vunpack.c.l.b16 %v361
        %v945 = vunpack.c.l.b16 %v362
        %v946 = vunpack.c.l.b16 %v363
        %v947 = vunpack.c.l.b16 %v364
        %v948 = vunpack.c.l.b16 %v365
        %v949 = vunpack.c.l.b16 %v366
        %v950 = vunpack.c.l.b16 %v367
        %v951 = vunpack.c.l.b16 %v368
        %v952 = vunpack.c.l.b16 %v369
        %v953 = vunpack.c.l.b16 %v370
        %v954 = vunpack.c.l.b16 %v371
        %v955 = vunpack.c.l.b16 %v372
        %v956 = vunpack.c.l.b16 %v373
        %v957 = vunpack.c.l.b16 %v374
        %v958 = vunpack.c.l.b16 %v375
        %v959 = vunpack.c.l.b16 %v376
        %v960 = vunpack.c.l.b16 %v377
        %v961 = vunpack.c.l.b16 %v378
        %v962 = vunpack.c.l.b16 %v379
        %v963 = vunpack.c.l.b16 %v380
        %v964 = vunpack.c.l.b16 %v381
        %v965 = vpack.c.b16 %v918, %v917
        %v966 = vpack.c.b16 %v920, %v919
        %v967 = vpack.c.b16 %v922, %v921
        %v968 = vpack.c.b16 %v924, %v923
        %v969 = vpack.c.b16 %v926, %v925
        %v970 = vpack.c.b16 %v928, %v927
        %v971 = vpack.c.b16 %v930, %v929
        %v972 = vpack.c.b16 %v932, %v931
        %v973 = vpack.c.b16 %v934, %v933
        %v974 = vpack.c.b16 %v936, %v935
        %v975 = vpack.c.b16 %v938, %v937
        %v976 = vpack.c.b16 %v940, %v939
        %v977 = vpack.c.b16 %v942, %v941
        %v978 = vpack.c.b16 %v944, %v943
        %v979 = vpack.c.b16 %v946, %v945
        %v980 = vpack.c.b16 %v948, %v947
        %v981 = vpack.c.b16 %v950, %v949
        %v982 = vpack.c.b16 %v952, %v951
        %v983 = vpack.c.b16 %v954, %v953
        %v984 = vpack.c.b16 %v956, %v955
        %v985 = vpack.c.b16 %v958, %v957
        %v986 = vpack.c.b16 %v960, %v959
        %v987 = vpack.c.b16 %v962, %v961
        %v988 = vpack.c.b16 %v964, %v963
        %1013 = vmatpush.bf16.msra.mxu0 %v972
        %1014 = vmatpush.bf16.msra.mxu0 %v971
        %1015 = vmatpush.bf16.msra.mxu0 %v970
        %1016 = vmatpush.bf16.msra.mxu0 %v969
        %1017 = vmatpush.bf16.msra.mxu0 %v968
        %1018 = vmatpush.bf16.msra.mxu0 %v967
        %1019 = vmatpush.bf16.msra.mxu0 %v966
        %1020 = vmatpush.bf16.msra.mxu0 %v965
        %1021 = vmatmul.bf16.gmra.mxu0 %v863
        %v1022 = vpop.f32.mrf.mxu0
        %v1023 = vadd.f32 0.0, %v1022
        %v1024 = vpop.f32.mrf.mxu0
        %1025 = vdwg.mxu0
        %1026 = vmatpush.bf16.msra.mxu0 %v980
        %1027 = vmatpush.bf16.msra.mxu0 %v979
        %1028 = vmatpush.bf16.msra.mxu0 %v978
        %1029 = vmatpush.bf16.msra.mxu0 %v977
        %1030 = vmatpush.bf16.msra.mxu0 %v976
        %1031 = vmatpush.bf16.msra.mxu0 %v975
        %1032 = vmatpush.bf16.msra.mxu0 %v974
        %1033 = vmatpush.bf16.msra.mxu0 %v973
        %1034 = vmatmul.bf16.gmra.mxu0 %v864
        %v1035 = vpop.f32.mrf.mxu0
        %v1036 = vadd.f32 %v1023, %v1035
        %v1037 = vpop.f32.mrf.mxu0
        %1038 = vdwg.mxu0
        %1039 = vmatpush.bf16.msra.mxu0 %v988
        %1040 = vmatpush.bf16.msra.mxu0 %v987
        %1041 = vmatpush.bf16.msra.mxu0 %v986
        %1042 = vmatpush.bf16.msra.mxu0 %v985
        %1043 = vmatpush.bf16.msra.mxu0 %v984
        %1044 = vmatpush.bf16.msra.mxu0 %v983
        %1045 = vmatpush.bf16.msra.mxu0 %v982
        %1046 = vmatpush.bf16.msra.mxu0 %v981
        %1047 = vmatmul.bf16.gmra.mxu0 %v865
        %v1048 = vpop.f32.mrf.mxu0
        %v1049 = vadd.f32 %v1036, %v1048
        %v1050 = vpop.f32.mrf.mxu0
        %1051 = vdwg.mxu0
        %1053 = vst [vmem:[#allocation1] ss:$9 sm:$0xff] %v280
        %v1054 = vld [vmem:[#allocation1] sm:$0xff]
        %v1055 = vld [vmem:[#allocation1 + $0x9] sm:$0xff]
        %v1056 = vld [vmem:[#allocation1 + $0x12] sm:$0xff]
        %v1108 = vunpack.c.l.b16 %v382
        %v1109 = vunpack.c.l.b16 %v383
        %v1110 = vunpack.c.l.b16 %v384
        %v1111 = vunpack.c.l.b16 %v385
        %v1112 = vunpack.c.l.b16 %v386
        %v1113 = vunpack.c.l.b16 %v387
        %v1114 = vunpack.c.l.b16 %v388
        %v1115 = vunpack.c.l.b16 %v389
        %v1116 = vunpack.c.l.b16 %v390
        %v1117 = vunpack.c.l.b16 %v391
        %v1118 = vunpack.c.l.b16 %v392
        %v1119 = vunpack.c.l.b16 %v393
        %v1120 = vunpack.c.l.b16 %v394
        %v1121 = vunpack.c.l.b16 %v395
        %v1122 = vunpack.c.l.b16 %v396
        %v1123 = vunpack.c.l.b16 %v397
        %v1124 = vunpack.c.l.b16 %v398
        %v1125 = vunpack.c.l.b16 %v399
        %v1126 = vunpack.c.l.b16 %v400
        %v1127 = vunpack.c.l.b16 %v401
        %v1128 = vunpack.c.l.b16 %v402
        %v1129 = vunpack.c.l.b16 %v403
        %v1130 = vunpack.c.l.b16 %v404
        %v1131 = vunpack.c.l.b16 %v405
        %v1132 = vunpack.c.l.b16 %v406
        %v1133 = vunpack.c.l.b16 %v407
        %v1134 = vunpack.c.l.b16 %v408
        %v1135 = vunpack.c.l.b16 %v409
        %v1136 = vunpack.c.l.b16 %v410
        %v1137 = vunpack.c.l.b16 %v411
        %v1138 = vunpack.c.l.b16 %v412
        %v1139 = vunpack.c.l.b16 %v413
        %v1140 = vunpack.c.l.b16 %v414
        %v1141 = vunpack.c.l.b16 %v415
        %v1142 = vunpack.c.l.b16 %v416
        %v1143 = vunpack.c.l.b16 %v417
        %v1144 = vunpack.c.l.b16 %v418
        %v1145 = vunpack.c.l.b16 %v419
        %v1146 = vunpack.c.l.b16 %v420
        %v1147 = vunpack.c.l.b16 %v421
        %v1148 = vunpack.c.l.b16 %v422
        %v1149 = vunpack.c.l.b16 %v423
        %v1150 = vunpack.c.l.b16 %v424
        %v1151 = vunpack.c.l.b16 %v425
        %v1152 = vunpack.c.l.b16 %v426
        %v1153 = vunpack.c.l.b16 %v427
        %v1154 = vunpack.c.l.b16 %v428
        %v1155 = vunpack.c.l.b16 %v429
        %v1156 = vpack.c.b16 %v1109, %v1108
        %v1157 = vpack.c.b16 %v1111, %v1110
        %v1158 = vpack.c.b16 %v1113, %v1112
        %v1159 = vpack.c.b16 %v1115, %v1114
        %v1160 = vpack.c.b16 %v1117, %v1116
        %v1161 = vpack.c.b16 %v1119, %v1118
        %v1162 = vpack.c.b16 %v1121, %v1120
        %v1163 = vpack.c.b16 %v1123, %v1122
        %v1164 = vpack.c.b16 %v1125, %v1124
        %v1165 = vpack.c.b16 %v1127, %v1126
        %v1166 = vpack.c.b16 %v1129, %v1128
        %v1167 = vpack.c.b16 %v1131, %v1130
        %v1168 = vpack.c.b16 %v1133, %v1132
        %v1169 = vpack.c.b16 %v1135, %v1134
        %v1170 = vpack.c.b16 %v1137, %v1136
        %v1171 = vpack.c.b16 %v1139, %v1138
        %v1172 = vpack.c.b16 %v1141, %v1140
        %v1173 = vpack.c.b16 %v1143, %v1142
        %v1174 = vpack.c.b16 %v1145, %v1144
        %v1175 = vpack.c.b16 %v1147, %v1146
        %v1176 = vpack.c.b16 %v1149, %v1148
        %v1177 = vpack.c.b16 %v1151, %v1150
        %v1178 = vpack.c.b16 %v1153, %v1152
        %v1179 = vpack.c.b16 %v1155, %v1154
        %1204 = vmatpush.bf16.msra.mxu0 %v1163
        %1205 = vmatpush.bf16.msra.mxu0 %v1162
        %1206 = vmatpush.bf16.msra.mxu0 %v1161
        %1207 = vmatpush.bf16.msra.mxu0 %v1160
        %1208 = vmatpush.bf16.msra.mxu0 %v1159
        %1209 = vmatpush.bf16.msra.mxu0 %v1158
        %1210 = vmatpush.bf16.msra.mxu0 %v1157
        %1211 = vmatpush.bf16.msra.mxu0 %v1156
        %1212 = vmatmul.bf16.gmra.mxu0 %v1054
        %v1213 = vpop.f32.mrf.mxu0
        %v1214 = vadd.f32 0.0, %v1213
        %v1215 = vpop.f32.mrf.mxu0
        %1216 = vdwg.mxu0
        %1217 = vmatpush.bf16.msra.mxu0 %v1171
        %1218 = vmatpush.bf16.msra.mxu0 %v1170
        %1219 = vmatpush.bf16.msra.mxu0 %v1169
        %1220 = vmatpush.bf16.msra.mxu0 %v1168
        %1221 = vmatpush.bf16.msra.mxu0 %v1167
        %1222 = vmatpush.bf16.msra.mxu0 %v1166
        %1223 = vmatpush.bf16.msra.mxu0 %v1165
        %1224 = vmatpush.bf16.msra.mxu0 %v1164
        %1225 = vmatmul.bf16.gmra.mxu0 %v1055
        %v1226 = vpop.f32.mrf.mxu0
        %v1227 = vadd.f32 %v1214, %v1226
        %v1228 = vpop.f32.mrf.mxu0
        %1229 = vdwg.mxu0
        %1230 = vmatpush.bf16.msra.mxu0 %v1179
        %1231 = vmatpush.bf16.msra.mxu0 %v1178
        %1232 = vmatpush.bf16.msra.mxu0 %v1177
        %1233 = vmatpush.bf16.msra.mxu0 %v1176
        %1234 = vmatpush.bf16.msra.mxu0 %v1175
        %1235 = vmatpush.bf16.msra.mxu0 %v1174
        %1236 = vmatpush.bf16.msra.mxu0 %v1173
        %1237 = vmatpush.bf16.msra.mxu0 %v1172
        %1238 = vmatmul.bf16.gmra.mxu0 %v1056
        %v1239 = vpop.f32.mrf.mxu0
        %v1240 = vadd.f32 %v1227, %v1239
        %v1241 = vpop.f32.mrf.mxu0
        %1242 = vdwg.mxu0
        %1244 = vst [vmem:[#allocation1] ss:$9 sm:$0xff] %v281
        %v1245 = vld [vmem:[#allocation1] sm:$0xff]
        %v1246 = vld [vmem:[#allocation1 + $0x9] sm:$0xff]
        %v1247 = vld [vmem:[#allocation1 + $0x12] sm:$0xff]
        %v1299 = vunpack.c.l.b16 %v430
        %v1300 = vunpack.c.l.b16 %v431
        %v1301 = vunpack.c.l.b16 %v432
        %v1302 = vunpack.c.l.b16 %v433
        %v1303 = vunpack.c.l.b16 %v434
        %v1304 = vunpack.c.l.b16 %v435
        %v1305 = vunpack.c.l.b16 %v436
        %v1306 = vunpack.c.l.b16 %v437
        %v1307 = vunpack.c.l.b16 %v438
        %v1308 = vunpack.c.l.b16 %v439
        %v1309 = vunpack.c.l.b16 %v440
        %v1310 = vunpack.c.l.b16 %v441
        %v1311 = vunpack.c.l.b16 %v442
        %v1312 = vunpack.c.l.b16 %v443
        %v1313 = vunpack.c.l.b16 %v444
        %v1314 = vunpack.c.l.b16 %v445
        %v1315 = vunpack.c.l.b16 %v446
        %v1316 = vunpack.c.l.b16 %v447
        %v1317 = vunpack.c.l.b16 %v448
        %v1318 = vunpack.c.l.b16 %v449
        %v1319 = vunpack.c.l.b16 %v450
        %v1320 = vunpack.c.l.b16 %v451
        %v1321 = vunpack.c.l.b16 %v452
        %v1322 = vunpack.c.l.b16 %v453
        %v1323 = vunpack.c.l.b16 %v454
        %v1324 = vunpack.c.l.b16 %v455
        %v1325 = vunpack.c.l.b16 %v456
        %v1326 = vunpack.c.l.b16 %v457
        %v1327 = vunpack.c.l.b16 %v458
        %v1328 = vunpack.c.l.b16 %v459
        %v1329 = vunpack.c.l.b16 %v460
        %v1330 = vunpack.c.l.b16 %v461
        %v1331 = vunpack.c.l.b16 %v462
        %v1332 = vunpack.c.l.b16 %v463
        %v1333 = vunpack.c.l.b16 %v464
        %v1334 = vunpack.c.l.b16 %v465
        %v1335 = vunpack.c.l.b16 %v466
        %v1336 = vunpack.c.l.b16 %v467
        %v1337 = vunpack.c.l.b16 %v468
        %v1338 = vunpack.c.l.b16 %v469
        %v1339 = vunpack.c.l.b16 %v470
        %v1340 = vunpack.c.l.b16 %v471
        %v1341 = vunpack.c.l.b16 %v472
        %v1342 = vunpack.c.l.b16 %v473
        %v1343 = vunpack.c.l.b16 %v474
        %v1344 = vunpack.c.l.b16 %v475
        %v1345 = vunpack.c.l.b16 %v476
        %v1346 = vunpack.c.l.b16 %v477
        %v1347 = vpack.c.b16 %v1300, %v1299
        %v1348 = vpack.c.b16 %v1302, %v1301
        %v1349 = vpack.c.b16 %v1304, %v1303
        %v1350 = vpack.c.b16 %v1306, %v1305
        %v1351 = vpack.c.b16 %v1308, %v1307
        %v1352 = vpack.c.b16 %v1310, %v1309
        %v1353 = vpack.c.b16 %v1312, %v1311
        %v1354 = vpack.c.b16 %v1314, %v1313
        %v1355 = vpack.c.b16 %v1316, %v1315
        %v1356 = vpack.c.b16 %v1318, %v1317
        %v1357 = vpack.c.b16 %v1320, %v1319
        %v1358 = vpack.c.b16 %v1322, %v1321
        %v1359 = vpack.c.b16 %v1324, %v1323
        %v1360 = vpack.c.b16 %v1326, %v1325
        %v1361 = vpack.c.b16 %v1328, %v1327
        %v1362 = vpack.c.b16 %v1330, %v1329
        %v1363 = vpack.c.b16 %v1332, %v1331
        %v1364 = vpack.c.b16 %v1334, %v1333
        %v1365 = vpack.c.b16 %v1336, %v1335
        %v1366 = vpack.c.b16 %v1338, %v1337
        %v1367 = vpack.c.b16 %v1340, %v1339
        %v1368 = vpack.c.b16 %v1342, %v1341
        %v1369 = vpack.c.b16 %v1344, %v1343
        %v1370 = vpack.c.b16 %v1346, %v1345
        %1395 = vmatpush.bf16.msra.mxu0 %v1354
        %1396 = vmatpush.bf16.msra.mxu0 %v1353
        %1397 = vmatpush.bf16.msra.mxu0 %v1352
        %1398 = vmatpush.bf16.msra.mxu0 %v1351
        %1399 = vmatpush.bf16.msra.mxu0 %v1350
        %1400 = vmatpush.bf16.msra.mxu0 %v1349
        %1401 = vmatpush.bf16.msra.mxu0 %v1348
        %1402 = vmatpush.bf16.msra.mxu0 %v1347
        %1403 = vmatmul.bf16.gmra.mxu0 %v1245
        %v1404 = vpop.f32.mrf.mxu0
        %v1405 = vadd.f32 0.0, %v1404
        %v1406 = vpop.f32.mrf.mxu0
        %1407 = vdwg.mxu0
        %1408 = vmatpush.bf16.msra.mxu0 %v1362
        %1409 = vmatpush.bf16.msra.mxu0 %v1361
        %1410 = vmatpush.bf16.msra.mxu0 %v1360
        %1411 = vmatpush.bf16.msra.mxu0 %v1359
        %1412 = vmatpush.bf16.msra.mxu0 %v1358
        %1413 = vmatpush.bf16.msra.mxu0 %v1357
        %1414 = vmatpush.bf16.msra.mxu0 %v1356
        %1415 = vmatpush.bf16.msra.mxu0 %v1355
        %1416 = vmatmul.bf16.gmra.mxu0 %v1246
        %v1417 = vpop.f32.mrf.mxu0
        %v1418 = vadd.f32 %v1405, %v1417
        %v1419 = vpop.f32.mrf.mxu0
        %1420 = vdwg.mxu0
        %1421 = vmatpush.bf16.msra.mxu0 %v1370
        %1422 = vmatpush.bf16.msra.mxu0 %v1369
        %1423 = vmatpush.bf16.msra.mxu0 %v1368
        %1424 = vmatpush.bf16.msra.mxu0 %v1367
        %1425 = vmatpush.bf16.msra.mxu0 %v1366
        %1426 = vmatpush.bf16.msra.mxu0 %v1365
        %1427 = vmatpush.bf16.msra.mxu0 %v1364
        %1428 = vmatpush.bf16.msra.mxu0 %v1363
        %1429 = vmatmul.bf16.gmra.mxu0 %v1247
        %v1430 = vpop.f32.mrf.mxu0
        %v1431 = vadd.f32 %v1418, %v1430
        %v1432 = vpop.f32.mrf.mxu0
        %1433 = vdwg.mxu0
        %1435 = vst [vmem:[#allocation1] ss:$9 sm:$0xff] %v282
        %v1436 = vld [vmem:[#allocation1] sm:$0xff]
        %v1437 = vld [vmem:[#allocation1 + $0x9] sm:$0xff]
        %v1438 = vld [vmem:[#allocation1 + $0x12] sm:$0xff]
        %v1490 = vunpack.c.l.b16 %v478
        %v1491 = vunpack.c.l.b16 %v479
        %v1492 = vunpack.c.l.b16 %v480
        %v1493 = vunpack.c.l.b16 %v481
        %v1494 = vunpack.c.l.b16 %v482
        %v1495 = vunpack.c.l.b16 %v483
        %v1496 = vunpack.c.l.b16 %v484
        %v1497 = vunpack.c.l.b16 %v485
        %v1498 = vunpack.c.l.b16 %v486
        %v1499 = vunpack.c.l.b16 %v487
        %v1500 = vunpack.c.l.b16 %v488
        %v1501 = vunpack.c.l.b16 %v489
        %v1502 = vunpack.c.l.b16 %v490
        %v1503 = vunpack.c.l.b16 %v491
        %v1504 = vunpack.c.l.b16 %v492
        %v1505 = vunpack.c.l.b16 %v493
        %v1506 = vunpack.c.l.b16 %v494
        %v1507 = vunpack.c.l.b16 %v495
        %v1508 = vunpack.c.l.b16 %v496
        %v1509 = vunpack.c.l.b16 %v497
        %v1510 = vunpack.c.l.b16 %v498
        %v1511 = vunpack.c.l.b16 %v499
        %v1512 = vunpack.c.l.b16 %v500
        %v1513 = vunpack.c.l.b16 %v501
        %v1514 = vunpack.c.l.b16 %v502
        %v1515 = vunpack.c.l.b16 %v503
        %v1516 = vunpack.c.l.b16 %v504
        %v1517 = vunpack.c.l.b16 %v505
        %v1518 = vunpack.c.l.b16 %v506
        %v1519 = vunpack.c.l.b16 %v507
        %v1520 = vunpack.c.l.b16 %v508
        %v1521 = vunpack.c.l.b16 %v509
        %v1522 = vunpack.c.l.b16 %v510
        %v1523 = vunpack.c.l.b16 %v511
        %v1524 = vunpack.c.l.b16 %v512
        %v1525 = vunpack.c.l.b16 %v513
        %v1526 = vunpack.c.l.b16 %v514
        %v1527 = vunpack.c.l.b16 %v515
        %v1528 = vunpack.c.l.b16 %v516
        %v1529 = vunpack.c.l.b16 %v517
        %v1530 = vunpack.c.l.b16 %v518
        %v1531 = vunpack.c.l.b16 %v519
        %v1532 = vunpack.c.l.b16 %v520
        %v1533 = vunpack.c.l.b16 %v521
        %v1534 = vunpack.c.l.b16 %v522
        %v1535 = vunpack.c.l.b16 %v523
        %v1536 = vunpack.c.l.b16 %v524
        %v1537 = vunpack.c.l.b16 %v525
        %v1538 = vpack.c.b16 %v1491, %v1490
        %v1539 = vpack.c.b16 %v1493, %v1492
        %v1540 = vpack.c.b16 %v1495, %v1494
        %v1541 = vpack.c.b16 %v1497, %v1496
        %v1542 = vpack.c.b16 %v1499, %v1498
        %v1543 = vpack.c.b16 %v1501, %v1500
        %v1544 = vpack.c.b16 %v1503, %v1502
        %v1545 = vpack.c.b16 %v1505, %v1504
        %v1546 = vpack.c.b16 %v1507, %v1506
        %v1547 = vpack.c.b16 %v1509, %v1508
        %v1548 = vpack.c.b16 %v1511, %v1510
        %v1549 = vpack.c.b16 %v1513, %v1512
        %v1550 = vpack.c.b16 %v1515, %v1514
        %v1551 = vpack.c.b16 %v1517, %v1516
        %v1552 = vpack.c.b16 %v1519, %v1518
        %v1553 = vpack.c.b16 %v1521, %v1520
        %v1554 = vpack.c.b16 %v1523, %v1522
        %v1555 = vpack.c.b16 %v1525, %v1524
        %v1556 = vpack.c.b16 %v1527, %v1526
        %v1557 = vpack.c.b16 %v1529, %v1528
        %v1558 = vpack.c.b16 %v1531, %v1530
        %v1559 = vpack.c.b16 %v1533, %v1532
        %v1560 = vpack.c.b16 %v1535, %v1534
        %v1561 = vpack.c.b16 %v1537, %v1536
        %1586 = vmatpush.bf16.msra.mxu0 %v1545
        %1587 = vmatpush.bf16.msra.mxu0 %v1544
        %1588 = vmatpush.bf16.msra.mxu0 %v1543
        %1589 = vmatpush.bf16.msra.mxu0 %v1542
        %1590 = vmatpush.bf16.msra.mxu0 %v1541
        %1591 = vmatpush.bf16.msra.mxu0 %v1540
        %1592 = vmatpush.bf16.msra.mxu0 %v1539
        %1593 = vmatpush.bf16.msra.mxu0 %v1538
        %1594 = vmatmul.bf16.gmra.mxu0 %v1436
        %v1595 = vpop.f32.mrf.mxu0
        %v1596 = vadd.f32 0.0, %v1595
        %v1597 = vpop.f32.mrf.mxu0
        %1598 = vdwg.mxu0
        %1599 = vmatpush.bf16.msra.mxu0 %v1553
        %1600 = vmatpush.bf16.msra.mxu0 %v1552
        %1601 = vmatpush.bf16.msra.mxu0 %v1551
        %1602 = vmatpush.bf16.msra.mxu0 %v1550
        %1603 = vmatpush.bf16.msra.mxu0 %v1549
        %1604 = vmatpush.bf16.msra.mxu0 %v1548
        %1605 = vmatpush.bf16.msra.mxu0 %v1547
        %1606 = vmatpush.bf16.msra.mxu0 %v1546
        %1607 = vmatmul.bf16.gmra.mxu0 %v1437
        %v1608 = vpop.f32.mrf.mxu0
        %v1609 = vadd.f32 %v1596, %v1608
        %v1610 = vpop.f32.mrf.mxu0
        %1611 = vdwg.mxu0
        %1612 = vmatpush.bf16.msra.mxu0 %v1561
        %1613 = vmatpush.bf16.msra.mxu0 %v1560
        %1614 = vmatpush.bf16.msra.mxu0 %v1559
        %1615 = vmatpush.bf16.msra.mxu0 %v1558
        %1616 = vmatpush.bf16.msra.mxu0 %v1557
        %1617 = vmatpush.bf16.msra.mxu0 %v1556
        %1618 = vmatpush.bf16.msra.mxu0 %v1555
        %1619 = vmatpush.bf16.msra.mxu0 %v1554
        %1620 = vmatmul.bf16.gmra.mxu0 %v1438
        %v1621 = vpop.f32.mrf.mxu0
        %v1622 = vadd.f32 %v1609, %v1621
        %v1623 = vpop.f32.mrf.mxu0
        %1624 = vdwg.mxu0
        %1626 = vst [vmem:[#allocation1] ss:$9 sm:$0xff] %v283
        %v1627 = vld [vmem:[#allocation1] sm:$0xff]
        %v1628 = vld [vmem:[#allocation1 + $0x9] sm:$0xff]
        %v1629 = vld [vmem:[#allocation1 + $0x12] sm:$0xff]
        %v1681 = vunpack.c.l.b16 %v526
        %v1682 = vunpack.c.l.b16 %v527
        %v1683 = vunpack.c.l.b16 %v528
        %v1684 = vunpack.c.l.b16 %v529
        %v1685 = vunpack.c.l.b16 %v530
        %v1686 = vunpack.c.l.b16 %v531
        %v1687 = vunpack.c.l.b16 %v532
        %v1688 = vunpack.c.l.b16 %v533
        %v1689 = vunpack.c.l.b16 %v534
        %v1690 = vunpack.c.l.b16 %v535
        %v1691 = vunpack.c.l.b16 %v536
        %v1692 = vunpack.c.l.b16 %v537
        %v1693 = vunpack.c.l.b16 %v538
        %v1694 = vunpack.c.l.b16 %v539
        %v1695 = vunpack.c.l.b16 %v540
        %v1696 = vunpack.c.l.b16 %v541
        %v1697 = vunpack.c.l.b16 %v542
        %v1698 = vunpack.c.l.b16 %v543
        %v1699 = vunpack.c.l.b16 %v544
        %v1700 = vunpack.c.l.b16 %v545
        %v1701 = vunpack.c.l.b16 %v546
        %v1702 = vunpack.c.l.b16 %v547
        %v1703 = vunpack.c.l.b16 %v548
        %v1704 = vunpack.c.l.b16 %v549
        %v1705 = vunpack.c.l.b16 %v550
        %v1706 = vunpack.c.l.b16 %v551
        %v1707 = vunpack.c.l.b16 %v552
        %v1708 = vunpack.c.l.b16 %v553
        %v1709 = vunpack.c.l.b16 %v554
        %v1710 = vunpack.c.l.b16 %v555
        %v1711 = vunpack.c.l.b16 %v556
        %v1712 = vunpack.c.l.b16 %v557
        %v1713 = vunpack.c.l.b16 %v558
        %v1714 = vunpack.c.l.b16 %v559
        %v1715 = vunpack.c.l.b16 %v560
        %v1716 = vunpack.c.l.b16 %v561
        %v1717 = vunpack.c.l.b16 %v562
        %v1718 = vunpack.c.l.b16 %v563
        %v1719 = vunpack.c.l.b16 %v564
        %v1720 = vunpack.c.l.b16 %v565
        %v1721 = vunpack.c.l.b16 %v566
        %v1722 = vunpack.c.l.b16 %v567
        %v1723 = vunpack.c.l.b16 %v568
        %v1724 = vunpack.c.l.b16 %v569
        %v1725 = vunpack.c.l.b16 %v570
        %v1726 = vunpack.c.l.b16 %v571
        %v1727 = vunpack.c.l.b16 %v572
        %v1728 = vunpack.c.l.b16 %v573
        %v1729 = vpack.c.b16 %v1682, %v1681
        %v1730 = vpack.c.b16 %v1684, %v1683
        %v1731 = vpack.c.b16 %v1686, %v1685
        %v1732 = vpack.c.b16 %v1688, %v1687
        %v1733 = vpack.c.b16 %v1690, %v1689
        %v1734 = vpack.c.b16 %v1692, %v1691
        %v1735 = vpack.c.b16 %v1694, %v1693
        %v1736 = vpack.c.b16 %v1696, %v1695
        %v1737 = vpack.c.b16 %v1698, %v1697
        %v1738 = vpack.c.b16 %v1700, %v1699
        %v1739 = vpack.c.b16 %v1702, %v1701
        %v1740 = vpack.c.b16 %v1704, %v1703
        %v1741 = vpack.c.b16 %v1706, %v1705
        %v1742 = vpack.c.b16 %v1708, %v1707
        %v1743 = vpack.c.b16 %v1710, %v1709
        %v1744 = vpack.c.b16 %v1712, %v1711
        %v1745 = vpack.c.b16 %v1714, %v1713
        %v1746 = vpack.c.b16 %v1716, %v1715
        %v1747 = vpack.c.b16 %v1718, %v1717
        %v1748 = vpack.c.b16 %v1720, %v1719
        %v1749 = vpack.c.b16 %v1722, %v1721
        %v1750 = vpack.c.b16 %v1724, %v1723
        %v1751 = vpack.c.b16 %v1726, %v1725
        %v1752 = vpack.c.b16 %v1728, %v1727
        %1777 = vmatpush.bf16.msra.mxu0 %v1736
        %1778 = vmatpush.bf16.msra.mxu0 %v1735
        %1779 = vmatpush.bf16.msra.mxu0 %v1734
        %1780 = vmatpush.bf16.msra.mxu0 %v1733
        %1781 = vmatpush.bf16.msra.mxu0 %v1732
        %1782 = vmatpush.bf16.msra.mxu0 %v1731
        %1783 = vmatpush.bf16.msra.mxu0 %v1730
        %1784 = vmatpush.bf16.msra.mxu0 %v1729
        %1785 = vmatmul.bf16.gmra.mxu0 %v1627
        %v1786 = vpop.f32.mrf.mxu0
        %v1787 = vadd.f32 0.0, %v1786
        %v1788 = vpop.f32.mrf.mxu0
        %1789 = vdwg.mxu0
        %1790 = vmatpush.bf16.msra.mxu0 %v1744
        %1791 = vmatpush.bf16.msra.mxu0 %v1743
        %1792 = vmatpush.bf16.msra.mxu0 %v1742
        %1793 = vmatpush.bf16.msra.mxu0 %v1741
        %1794 = vmatpush.bf16.msra.mxu0 %v1740
        %1795 = vmatpush.bf16.msra.mxu0 %v1739
        %1796 = vmatpush.bf16.msra.mxu0 %v1738
        %1797 = vmatpush.bf16.msra.mxu0 %v1737
        %1798 = vmatmul.bf16.gmra.mxu0 %v1628
        %v1799 = vpop.f32.mrf.mxu0
        %v1800 = vadd.f32 %v1787, %v1799
        %v1801 = vpop.f32.mrf.mxu0
        %1802 = vdwg.mxu0
        %1803 = vmatpush.bf16.msra.mxu0 %v1752
        %1804 = vmatpush.bf16.msra.mxu0 %v1751
        %1805 = vmatpush.bf16.msra.mxu0 %v1750
        %1806 = vmatpush.bf16.msra.mxu0 %v1749
        %1807 = vmatpush.bf16.msra.mxu0 %v1748
        %1808 = vmatpush.bf16.msra.mxu0 %v1747
        %1809 = vmatpush.bf16.msra.mxu0 %v1746
        %1810 = vmatpush.bf16.msra.mxu0 %v1745
        %1811 = vmatmul.bf16.gmra.mxu0 %v1629
        %v1812 = vpop.f32.mrf.mxu0
        %v1813 = vadd.f32 %v1800, %v1812
        %v1814 = vpop.f32.mrf.mxu0
        %1815 = vdwg.mxu0
        %1817 = vst [vmem:[#allocation1] ss:$9 sm:$0xff] %v284
        %v1818 = vld [vmem:[#allocation1] sm:$0xff]
        %v1819 = vld [vmem:[#allocation1 + $0x9] sm:$0xff]
        %v1820 = vld [vmem:[#allocation1 + $0x12] sm:$0xff]
        %v1872 = vunpack.c.l.b16 %v574
        %v1873 = vunpack.c.l.b16 %v575
        %v1874 = vunpack.c.l.b16 %v576
        %v1875 = vunpack.c.l.b16 %v577
        %v1876 = vunpack.c.l.b16 %v578
        %v1877 = vunpack.c.l.b16 %v579
        %v1878 = vunpack.c.l.b16 %v580
        %v1879 = vunpack.c.l.b16 %v581
        %v1880 = vunpack.c.l.b16 %v582
        %v1881 = vunpack.c.l.b16 %v583
        %v1882 = vunpack.c.l.b16 %v584
        %v1883 = vunpack.c.l.b16 %v585
        %v1884 = vunpack.c.l.b16 %v586
        %v1885 = vunpack.c.l.b16 %v587
        %v1886 = vunpack.c.l.b16 %v588
        %v1887 = vunpack.c.l.b16 %v589
        %v1888 = vunpack.c.l.b16 %v590
        %v1889 = vunpack.c.l.b16 %v591
        %v1890 = vunpack.c.l.b16 %v592
        %v1891 = vunpack.c.l.b16 %v593
        %v1892 = vunpack.c.l.b16 %v594
        %v1893 = vunpack.c.l.b16 %v595
        %v1894 = vunpack.c.l.b16 %v596
        %v1895 = vunpack.c.l.b16 %v597
        %v1896 = vunpack.c.l.b16 %v598
        %v1897 = vunpack.c.l.b16 %v599
        %v1898 = vunpack.c.l.b16 %v600
        %v1899 = vunpack.c.l.b16 %v601
        %v1900 = vunpack.c.l.b16 %v602
        %v1901 = vunpack.c.l.b16 %v603
        %v1902 = vunpack.c.l.b16 %v604
        %v1903 = vunpack.c.l.b16 %v605
        %v1904 = vunpack.c.l.b16 %v606
        %v1905 = vunpack.c.l.b16 %v607
        %v1906 = vunpack.c.l.b16 %v608
        %v1907 = vunpack.c.l.b16 %v609
        %v1908 = vunpack.c.l.b16 %v610
        %v1909 = vunpack.c.l.b16 %v611
        %v1910 = vunpack.c.l.b16 %v612
        %v1911 = vunpack.c.l.b16 %v613
        %v1912 = vunpack.c.l.b16 %v614
        %v1913 = vunpack.c.l.b16 %v615
        %v1914 = vunpack.c.l.b16 %v616
        %v1915 = vunpack.c.l.b16 %v617
        %v1916 = vunpack.c.l.b16 %v618
        %v1917 = vunpack.c.l.b16 %v619
        %v1918 = vunpack.c.l.b16 %v620
        %v1919 = vunpack.c.l.b16 %v621
        %v1920 = vpack.c.b16 %v1873, %v1872
        %v1921 = vpack.c.b16 %v1875, %v1874
        %v1922 = vpack.c.b16 %v1877, %v1876
        %v1923 = vpack.c.b16 %v1879, %v1878
        %v1924 = vpack.c.b16 %v1881, %v1880
        %v1925 = vpack.c.b16 %v1883, %v1882
        %v1926 = vpack.c.b16 %v1885, %v1884
        %v1927 = vpack.c.b16 %v1887, %v1886
        %v1928 = vpack.c.b16 %v1889, %v1888
        %v1929 = vpack.c.b16 %v1891, %v1890
        %v1930 = vpack.c.b16 %v1893, %v1892
        %v1931 = vpack.c.b16 %v1895, %v1894
        %v1932 = vpack.c.b16 %v1897, %v1896
        %v1933 = vpack.c.b16 %v1899, %v1898
        %v1934 = vpack.c.b16 %v1901, %v1900
        %v1935 = vpack.c.b16 %v1903, %v1902
        %v1936 = vpack.c.b16 %v1905, %v1904
        %v1937 = vpack.c.b16 %v1907, %v1906
        %v1938 = vpack.c.b16 %v1909, %v1908
        %v1939 = vpack.c.b16 %v1911, %v1910
        %v1940 = vpack.c.b16 %v1913, %v1912
        %v1941 = vpack.c.b16 %v1915, %v1914
        %v1942 = vpack.c.b16 %v1917, %v1916
        %v1943 = vpack.c.b16 %v1919, %v1918
        %1968 = vmatpush.bf16.msra.mxu0 %v1927
        %1969 = vmatpush.bf16.msra.mxu0 %v1926
        %1970 = vmatpush.bf16.msra.mxu0 %v1925
        %1971 = vmatpush.bf16.msra.mxu0 %v1924
        %1972 = vmatpush.bf16.msra.mxu0 %v1923
        %1973 = vmatpush.bf16.msra.mxu0 %v1922
        %1974 = vmatpush.bf16.msra.mxu0 %v1921
        %1975 = vmatpush.bf16.msra.mxu0 %v1920
        %1976 = vmatmul.bf16.gmra.mxu0 %v1818
        %v1977 = vpop.f32.mrf.mxu0
        %v1978 = vadd.f32 0.0, %v1977
        %v1979 = vpop.f32.mrf.mxu0
        %1980 = vdwg.mxu0
        %1981 = vmatpush.bf16.msra.mxu0 %v1935
        %1982 = vmatpush.bf16.msra.mxu0 %v1934
        %1983 = vmatpush.bf16.msra.mxu0 %v1933
        %1984 = vmatpush.bf16.msra.mxu0 %v1932
        %1985 = vmatpush.bf16.msra.mxu0 %v1931
        %1986 = vmatpush.bf16.msra.mxu0 %v1930
        %1987 = vmatpush.bf16.msra.mxu0 %v1929
        %1988 = vmatpush.bf16.msra.mxu0 %v1928
        %1989 = vmatmul.bf16.gmra.mxu0 %v1819
        %v1990 = vpop.f32.mrf.mxu0
        %v1991 = vadd.f32 %v1978, %v1990
        %v1992 = vpop.f32.mrf.mxu0
        %1993 = vdwg.mxu0
        %1994 = vmatpush.bf16.msra.mxu0 %v1943
        %1995 = vmatpush.bf16.msra.mxu0 %v1942
        %1996 = vmatpush.bf16.msra.mxu0 %v1941
        %1997 = vmatpush.bf16.msra.mxu0 %v1940
        %1998 = vmatpush.bf16.msra.mxu0 %v1939
        %1999 = vmatpush.bf16.msra.mxu0 %v1938
        %2000 = vmatpush.bf16.msra.mxu0 %v1937
        %2001 = vmatpush.bf16.msra.mxu0 %v1936
        %2002 = vmatmul.bf16.gmra.mxu0 %v1820
        %v2003 = vpop.f32.mrf.mxu0
        %v2004 = vadd.f32 %v1991, %v2003
        %v2005 = vpop.f32.mrf.mxu0
        %2006 = vdwg.mxu0
        %2008 = vst [vmem:[#allocation1] ss:$9 sm:$0xff] %v285
        %v2009 = vld [vmem:[#allocation1] sm:$0xff]
        %v2010 = vld [vmem:[#allocation1 + $0x9] sm:$0xff]
        %v2011 = vld [vmem:[#allocation1 + $0x12] sm:$0xff]
        %v2063 = vunpack.c.l.b16 %v622
        %v2064 = vunpack.c.l.b16 %v623
        %v2065 = vunpack.c.l.b16 %v624
        %v2066 = vunpack.c.l.b16 %v625
        %v2067 = vunpack.c.l.b16 %v626
        %v2068 = vunpack.c.l.b16 %v627
        %v2069 = vunpack.c.l.b16 %v628
        %v2070 = vunpack.c.l.b16 %v629
        %v2071 = vunpack.c.l.b16 %v630
        %v2072 = vunpack.c.l.b16 %v631
        %v2073 = vunpack.c.l.b16 %v632
        %v2074 = vunpack.c.l.b16 %v633
        %v2075 = vunpack.c.l.b16 %v634
        %v2076 = vunpack.c.l.b16 %v635
        %v2077 = vunpack.c.l.b16 %v636
        %v2078 = vunpack.c.l.b16 %v637
        %v2079 = vunpack.c.l.b16 %v638
        %v2080 = vunpack.c.l.b16 %v639
        %v2081 = vunpack.c.l.b16 %v640
        %v2082 = vunpack.c.l.b16 %v641
        %v2083 = vunpack.c.l.b16 %v642
        %v2084 = vunpack.c.l.b16 %v643
        %v2085 = vunpack.c.l.b16 %v644
        %v2086 = vunpack.c.l.b16 %v645
        %v2087 = vunpack.c.l.b16 %v646
        %v2088 = vunpack.c.l.b16 %v647
        %v2089 = vunpack.c.l.b16 %v648
        %v2090 = vunpack.c.l.b16 %v649
        %v2091 = vunpack.c.l.b16 %v650
        %v2092 = vunpack.c.l.b16 %v651
        %v2093 = vunpack.c.l.b16 %v652
        %v2094 = vunpack.c.l.b16 %v653
        %v2095 = vunpack.c.l.b16 %v654
        %v2096 = vunpack.c.l.b16 %v655
        %v2097 = vunpack.c.l.b16 %v656
        %v2098 = vunpack.c.l.b16 %v657
        %v2099 = vunpack.c.l.b16 %v658
        %v2100 = vunpack.c.l.b16 %v659
        %v2101 = vunpack.c.l.b16 %v660
        %v2102 = vunpack.c.l.b16 %v661
        %v2103 = vunpack.c.l.b16 %v662
        %v2104 = vunpack.c.l.b16 %v663
        %v2105 = vunpack.c.l.b16 %v664
        %v2106 = vunpack.c.l.b16 %v665
        %v2107 = vunpack.c.l.b16 %v666
        %v2108 = vunpack.c.l.b16 %v667
        %v2109 = vunpack.c.l.b16 %v668
        %v2110 = vunpack.c.l.b16 %v669
        %v2111 = vpack.c.b16 %v2064, %v2063
        %v2112 = vpack.c.b16 %v2066, %v2065
        %v2113 = vpack.c.b16 %v2068, %v2067
        %v2114 = vpack.c.b16 %v2070, %v2069
        %v2115 = vpack.c.b16 %v2072, %v2071
        %v2116 = vpack.c.b16 %v2074, %v2073
        %v2117 = vpack.c.b16 %v2076, %v2075
        %v2118 = vpack.c.b16 %v2078, %v2077
        %v2119 = vpack.c.b16 %v2080, %v2079
        %v2120 = vpack.c.b16 %v2082, %v2081
        %v2121 = vpack.c.b16 %v2084, %v2083
        %v2122 = vpack.c.b16 %v2086, %v2085
        %v2123 = vpack.c.b16 %v2088, %v2087
        %v2124 = vpack.c.b16 %v2090, %v2089
        %v2125 = vpack.c.b16 %v2092, %v2091
        %v2126 = vpack.c.b16 %v2094, %v2093
        %v2127 = vpack.c.b16 %v2096, %v2095
        %v2128 = vpack.c.b16 %v2098, %v2097
        %v2129 = vpack.c.b16 %v2100, %v2099
        %v2130 = vpack.c.b16 %v2102, %v2101
        %v2131 = vpack.c.b16 %v2104, %v2103
        %v2132 = vpack.c.b16 %v2106, %v2105
        %v2133 = vpack.c.b16 %v2108, %v2107
        %v2134 = vpack.c.b16 %v2110, %v2109
        %2159 = vmatpush.bf16.msra.mxu0 %v2118
        %2160 = vmatpush.bf16.msra.mxu0 %v2117
        %2161 = vmatpush.bf16.msra.mxu0 %v2116
        %2162 = vmatpush.bf16.msra.mxu0 %v2115
        %2163 = vmatpush.bf16.msra.mxu0 %v2114
        %2164 = vmatpush.bf16.msra.mxu0 %v2113
        %2165 = vmatpush.bf16.msra.mxu0 %v2112
        %2166 = vmatpush.bf16.msra.mxu0 %v2111
        %2167 = vmatmul.bf16.gmra.mxu0 %v2009
        %v2168 = vpop.f32.mrf.mxu0
        %v2169 = vadd.f32 0.0, %v2168
        %v2170 = vpop.f32.mrf.mxu0
        %2171 = vdwg.mxu0
        %2172 = vmatpush.bf16.msra.mxu0 %v2126
        %2173 = vmatpush.bf16.msra.mxu0 %v2125
        %2174 = vmatpush.bf16.msra.mxu0 %v2124
        %2175 = vmatpush.bf16.msra.mxu0 %v2123
        %2176 = vmatpush.bf16.msra.mxu0 %v2122
        %2177 = vmatpush.bf16.msra.mxu0 %v2121
        %2178 = vmatpush.bf16.msra.mxu0 %v2120
        %2179 = vmatpush.bf16.msra.mxu0 %v2119
        %2180 = vmatmul.bf16.gmra.mxu0 %v2010
        %v2181 = vpop.f32.mrf.mxu0
        %v2182 = vadd.f32 %v2169, %v2181
        %v2183 = vpop.f32.mrf.mxu0
        %2184 = vdwg.mxu0
        %2185 = vmatpush.bf16.msra.mxu0 %v2134
        %2186 = vmatpush.bf16.msra.mxu0 %v2133
        %2187 = vmatpush.bf16.msra.mxu0 %v2132
        %2188 = vmatpush.bf16.msra.mxu0 %v2131
        %2189 = vmatpush.bf16.msra.mxu0 %v2130
        %2190 = vmatpush.bf16.msra.mxu0 %v2129
        %2191 = vmatpush.bf16.msra.mxu0 %v2128
        %2192 = vmatpush.bf16.msra.mxu0 %v2127
        %2193 = vmatmul.bf16.gmra.mxu0 %v2011
        %v2194 = vpop.f32.mrf.mxu0
        %v2195 = vadd.f32 %v2182, %v2194
        %v2196 = vpop.f32.mrf.mxu0
        %2197 = vdwg.mxu0
        %v2198 = vadd.f32 %v270, %v858
        %v2199 = vadd.f32 %v271, %v1049
        %v2200 = vadd.f32 %v272, %v1240
        %v2201 = vadd.f32 %v273, %v1431
        %v2202 = vadd.f32 %v274, %v1622
        %v2203 = vadd.f32 %v275, %v1813
        %v2204 = vadd.f32 %v276, %v2004
        %v2205 = vadd.f32 %v277, %v2195
        %vm2206 = vcmask 516096
        %2207 = vst.msk [vmem:[#allocation2] sm:$0x1] %vm2206, %v2198
        %2208 = vst.msk [vmem:[#allocation2 + $0x1] sm:$0x1] %vm2206, %v2199
        %2209 = vst.msk [vmem:[#allocation2 + $0x2] sm:$0x1] %vm2206, %v2200
        %2210 = vst.msk [vmem:[#allocation2 + $0x3] sm:$0x1] %vm2206, %v2201
        %2211 = vst.msk [vmem:[#allocation2 + $0x4] sm:$0x1] %vm2206, %v2202
        %2212 = vst.msk [vmem:[#allocation2 + $0x5] sm:$0x1] %vm2206, %v2203
        %2213 = vst.msk [vmem:[#allocation2 + $0x6] sm:$0x1] %vm2206, %v2204
        %2214 = vst.msk [vmem:[#allocation2 + $0x7] sm:$0x1] %vm2206, %v2205
        // Predicated region
        $region37: #{tpu_custom_call.1} parent=31 // pred_check
          %p2215 = pneg %p257
        $region38: #{tpu_custom_call.1} parent=31 // pred_check_branch
          %2217 = sbr.rel (%p2215) target = $region40
        $region39: #{tpu_custom_call.1} parent=31 // pred_region
          %v2218 = vld [vmem:[#allocation2] sm:$0x1]
          %v2219 = vld [vmem:[#allocation2 + $0x1] sm:$0x1]
          %v2220 = vld [vmem:[#allocation2 + $0x2] sm:$0x1]
          %v2221 = vld [vmem:[#allocation2 + $0x3] sm:$0x1]
          %v2222 = vld [vmem:[#allocation2 + $0x4] sm:$0x1]
          %v2223 = vld [vmem:[#allocation2 + $0x5] sm:$0x1]
          %v2224 = vld [vmem:[#allocation2 + $0x6] sm:$0x1]
          %v2225 = vld [vmem:[#allocation2 + $0x7] sm:$0x1]
          %v2226 = vld [vmem:[%s256] sm:$0xff]
          %2228 = vset.pattern.permute.xlu0 0
          %2229 = vperm.xlu0 %2228, %v2226
          %v2230 = vpop.permute.xlu0 %2229
          %v2231 = vperm.slane %v2230, 0
          %v2232 = vperm.slane %v2230, 1
          %v2233 = vperm.slane %v2230, 2
          %v2234 = vperm.slane %v2230, 3
          %v2235 = vperm.slane %v2230, 4
          %v2236 = vperm.slane %v2230, 5
          %v2237 = vperm.slane %v2230, 6
          %v2238 = vperm.slane %v2230, 7
          %v2247 = vmul.f32 %v2218, %v2231
          %v2248 = vmul.f32 %v2219, %v2232
          %v2249 = vmul.f32 %v2220, %v2233
          %v2250 = vmul.f32 %v2221, %v2234
          %v2251 = vmul.f32 %v2222, %v2235
          %v2252 = vmul.f32 %v2223, %v2236
          %v2253 = vmul.f32 %v2224, %v2237
          %v2254 = vmul.f32 %v2225, %v2238
          %2263 = vst [vmem:[#allocation1] ss:$9 sm:$0xff] %v2247
          %s2264 = scalar_lea.vmem [#allocation1], 1
          %2265 = vst [vmem:[%s2264] ss:$9 sm:$0xff] %v2248
          %s2266 = scalar_lea.vmem [#allocation1], 2
          %2267 = vst [vmem:[%s2266] ss:$9 sm:$0xff] %v2249
          %s2268 = scalar_lea.vmem [#allocation1], 3
          %2269 = vst [vmem:[%s2268] ss:$9 sm:$0xff] %v2250
          %s2270 = scalar_lea.vmem [#allocation1], 4
          %2271 = vst [vmem:[%s2270] ss:$9 sm:$0xff] %v2251
          %s2272 = scalar_lea.vmem [#allocation1], 5
          %2273 = vst [vmem:[%s2272] ss:$9 sm:$0xff] %v2252
          %s2274 = scalar_lea.vmem [#allocation1], 6
          %2275 = vst [vmem:[%s2274] ss:$9 sm:$0xff] %v2253
          %s2276 = scalar_lea.vmem [#allocation1], 7
          %2277 = vst [vmem:[%s2276] ss:$9 sm:$0xff] %v2254
          %v2278 = vld [vmem:[#allocation1] sm:$0xff]
          %vm2280 = vcmask 523264
          %2281 = vst.msk [vmem:[%s229] sm:$0xff] %vm2280, %v2278
        $region40: #{tpu_custom_call.1} parent=31 // pred_fallthru
          _
        %s2282 = sand.u32 %s119, 1
        %s2283 = scalar_lea.sflag [#allocation4], %s2282
        %s2284 = sand.u32 %s119, 1
        %s2285 = smul.addr %s2284, 8
        %s2286 = scalar_lea.vmem [#allocation3], %s2285
        // Predicated region
        $region41: #{tpu_custom_call.1} parent=31 // pred_check
          %p2287 = pneg %p129
        $region42: #{tpu_custom_call.1} parent=31 // pred_check_branch
          %2289 = sbr.rel (%p2287) target = $region44
        $region43: #{tpu_custom_call.1} parent=31 // pred_region
          %2291 = vsyncadd %s2283, 0
          %s2292 = smul.addr %s21, 8
          %s2293 = scalar_lea.hbm %s3, %s2292
          %s2295 = sshll.u32 %s2286, 4
          %s2296 = int_to_ptr.vmem [resolvable:$true] %s2295
          %s2297 = sshll.u32 %s2293, 4
          %s2298 = int_to_ptr.hbm [resolvable:$true] %s2297
          %2300 = dma.vmem_to_hbm [thread:$0]  %s2296, 128, %s2298, %s2283
        $region44: #{tpu_custom_call.1} parent=31 // pred_fallthru
          _
      $region32: #{tpu_custom_call.1} parent=5 // pred_fallthru
        _
      %p2301 = scmp.le.s32.totalorder 2, %s12
      // Predicated region
      $region45: #{tpu_custom_call.1} parent=5 // pred_check
        %p2302 = pneg %p2301
      $region46: #{tpu_custom_call.1} parent=5 // pred_check_branch
        %2304 = sbr.rel (%p2302) target = $region48
      $region47: #{tpu_custom_call.1} parent=5 // pred_region
        %s2305 = ssub.s32 %s12, 2
        // Predicated region
        $region49: #{tpu_custom_call.1} parent=47 // pred_check
          %p2306 = pneg %p135
        $region50: #{tpu_custom_call.1} parent=47 // pred_check_branch
          %2308 = sbr.rel (%p2306) target = $region52
        $region51: #{tpu_custom_call.1} parent=47 // pred_region
          %s2309 = sand.u32 %s120, 1
          %s2310 = scalar_lea.sflag [#allocation4], %s2309
          %s2311 = sand.u32 %s120, 1
          %s2312 = smul.addr %s2311, 8
          %s2313 = scalar_lea.vmem [#allocation3], %s2312
          %2315 = dma.done %s2310, 128
        $region52: #{tpu_custom_call.1} parent=47 // pred_fallthru
          _
      $region48: #{tpu_custom_call.1} parent=5 // pred_fallthru
        _
    $region6: #{tpu_custom_call.1} parent=1 // loop_footer
      %s16 = sadd.s32 1, %s12
    $region7: #{tpu_custom_call.1} parent=1 // loop_footer_branch
      %11 = sbr.rel target = $region3
    $region8: #{tpu_custom_call.1} parent=1 // loop_exit
      _
    %2316 = vsyncpa [#allocation4], 1
    %s2317 = scalar_lea.sflag [#allocation4], 1
    %2318 = vsyncpa %s2317, 1

</llo_original>
